<compile_context>
chip_gen: v6e
topology: v6e:2x2x1
jax: 0.10.0
libtpu: 0.0.40
codegen_flags: <defaults>
</compile_context>

<pallas_src>
import jax
import jax.numpy as jnp
from jax.experimental import pallas as pl
from jax.experimental.pallas import tpu as pltpu

_C_PAD = 128        # conv2 / conv3 channel lanes padded to a full 128-lane tile
_ROW_STRIDE = 104   # per-sample row stride of the flat slabs (mult. of 8, >= 101)


def _fused_kernel(xg_ref, w1e_ref, w2_ref, w3c_ref, b3_ref, out_ref):
    """conv1+relu -> conv2+relu -> conv3+bias for one block of samples.

    xg_ref  : (bn*S, 12)   conv2 im2col of x pulled back through the pointwise
                           conv1 (row = n*S + ih*10 + iw, lane = tap*3 + cin;
                           all padding rows are exactly zero)
    w1e_ref : (12, 56)     block-diagonal conv1 weight (per-tap 3 -> 14)
    w2_ref  : (56, 128)    conv2 weight, taps folded into K, Cout 100->128
    w3c_ref : (128, 512)   conv3 weight, Cin 100->128, 4 taps on the lane axis
    b3_ref  : (1, 128)     conv3 bias, zero-padded
    out_ref : (bn*S, 128)  row = n*S + oh*10 + ow (rows >= 100 per sample junk)
    """
    # conv1 (1x1, stride 2, no bias) + ReLU: one MXU matmul, K = 12.
    p2 = jnp.maximum(
        jnp.dot(xg_ref[...], w1e_ref[...], preferred_element_type=jnp.float32),
        0.0)                                            # (bn*S, 56)
    # conv2 (2x2, stride 2, pad 1, no bias) + ReLU: one MXU matmul, K = 56.
    v5 = jnp.maximum(
        jnp.dot(p2, w2_ref[...], preferred_element_type=jnp.float32),
        0.0)                                            # (bn*S, 128)
    # conv3 (2x2, stride 1, pad 1): ONE large-M MXU matmul, K = 128, N = 512.
    # Lane block t = kh*2 + kw holds tap (kh, kw)'s partial products.
    y = jnp.dot(v5, w3c_ref[...], preferred_element_type=jnp.float32)

    # Both slabs use the same per-sample row stride and 10 entries per spatial
    # row, so tap (kh, kw) contributes to output row r from y-row
    # r - ((1-kh)*10 + (1-kw)). Every shifted read that falls outside a valid
    # 9x9 position lands on a zero row of the input slab (-> zero in y), so a
    # plain shifted accumulate is exact. Rows below a shift keep only the taps
    # already accumulated, which is also exact (those taps read conv padding).
    r = out_ref.shape[0]
    out_ref[...] = y[:, 3 * 128:4 * 128] + b3_ref[...]                   # tap (1,1), shift 0
    out_ref[1:r, :] = out_ref[1:r, :] + y[0:r - 1, 2 * 128:3 * 128]      # tap (1,0), shift 1
    out_ref[10:r, :] = out_ref[10:r, :] + y[0:r - 10, 1 * 128:2 * 128]   # tap (0,1), shift 10
    out_ref[11:r, :] = out_ref[11:r, :] + y[0:r - 11, 0 * 128:1 * 128]   # tap (0,0), shift 11


def prepare_params(params):
    """One-time repack of the HWIO weights into the kernel's layouts."""
    w1 = params["w1"].reshape(3, 14).astype(jnp.float32)            # (cin, cout)
    # Block-diagonal expansion: input lane t*3+cin -> output lane t*14+cout,
    # one block per conv2 tap t = kh*2 + kw.
    w1e = jnp.zeros((12, 56), jnp.float32)
    for t in range(4):
        w1e = w1e.at[t * 3:(t + 1) * 3, t * 14:(t + 1) * 14].set(w1)
    # conv2: row = (kh*2+kw)*14 + cin, out-channels padded 100 -> 128.
    w2 = params["w2"].reshape(56, 100).astype(jnp.float32)
    w2 = jnp.pad(w2, ((0, 0), (0, _C_PAD - 100)))
    # conv3: (tap, cin, cout) -> (cin_pad, tap*cout_pad) with zero padding.
    w3 = params["w3"].reshape(4, 100, 44).astype(jnp.float32)
    w3 = jnp.pad(w3, ((0, 0), (0, _C_PAD - 100), (0, _C_PAD - 44)))
    w3c = jnp.transpose(w3, (1, 0, 2)).reshape(_C_PAD, 4 * _C_PAD)
    b3 = jnp.pad(params["b3"].astype(jnp.float32), (0, _C_PAD - 44))
    return {"w1e": w1e, "w2": w2, "w3c": w3c, "b3": b3.reshape(1, _C_PAD)}


def model_forward(x_nchw, packed, *, block_n=2):
    assert x_nchw.shape[1:] == (3, 32, 32), x_nchw.shape
    N = x_nchw.shape[0]
    assert N % block_n == 0, (N, block_n)
    S = _ROW_STRIDE

    x = jnp.transpose(x_nchw, (0, 2, 3, 1)).astype(jnp.float32)     # NHWC

    # conv2's im2col pulled back through the pointwise conv1: conv2 tap
    # (kh, kw) at output (ih, iw) reads v2 at (2ih+kh-1, 2iw+kw-1), i.e. the
    # input at (4ih+2kh-2, 4iw+2kw-2). Zero padding commutes with the
    # bias-free conv1 + ReLU, so x-side zero padding is exact.
    xp = jnp.pad(x, ((0, 0), (2, 2), (2, 2), (0, 0)))                # (N, 36, 36, 3)
    taps = []
    for kh in (0, 1):
        for kw in (0, 1):
            taps.append(jax.lax.slice(
                xp, (0, 2 * kh, 2 * kw, 0),
                (N, 2 * kh + 33, 2 * kw + 33, 3), (1, 4, 4, 1)))     # (N, 9, 9, 3)
    xg = jnp.concatenate(taps, axis=-1)                              # (N, 9, 9, 12)
    # Flat slab with row = ih*10 + iw and per-sample stride S; padding rows
    # stay zero so conv3's shifted accumulates read exact zeros everywhere.
    xg = jnp.pad(xg, ((0, 0), (0, 0), (0, 1), (0, 0)))               # W 9 -> 10
    xg = xg.reshape(N, 90, 12)
    xg = jnp.pad(xg, ((0, 0), (0, S - 90), (0, 0))).reshape(N * S, 12)

    # v3 = v2[:, :, :-1, :-1] is dead code in the reference graph -> skipped.

    out = pl.pallas_call(
        _fused_kernel,
        out_shape=jax.ShapeDtypeStruct((N * S, _C_PAD), jnp.float32),
        grid=(N // block_n,),
        in_specs=[
            pl.BlockSpec((block_n * S, 12), lambda i: (i, 0)),
            pl.BlockSpec((12, 56), lambda i: (0, 0)),
            pl.BlockSpec((56, _C_PAD), lambda i: (0, 0)),
            pl.BlockSpec((_C_PAD, 4 * _C_PAD), lambda i: (0, 0)),
            pl.BlockSpec((1, _C_PAD), lambda i: (0, 0)),
        ],
        out_specs=pl.BlockSpec((block_n * S, _C_PAD), lambda i: (i, 0)),
        compiler_params=pltpu.CompilerParams(
            dimension_semantics=("parallel",)),
    )(xg, packed["w1e"], packed["w2"], packed["w3c"], packed["b3"])

    # Drop the lane / row padding and return NCHW like the PyTorch module.
    v6 = out.reshape(N, S, _C_PAD)[:, :100, :44].reshape(N, 10, 10, 44)
    return jnp.transpose(v6, (0, 3, 1, 2))


def ref_forward(x_nchw, params):
    """Pure-JAX reference (lax.conv) of the same well-defined prefix."""
    dn = ("NHWC", "HWIO", "NHWC")
    x = jnp.transpose(x_nchw, (0, 2, 3, 1))
    v1 = jax.lax.conv_general_dilated(x, params["w1"], (2, 2), "VALID",
                                      dimension_numbers=dn)
    v2 = jax.nn.relu(v1)
    v4 = jax.lax.conv_general_dilated(v2, params["w2"], (2, 2),
                                      ((1, 1), (1, 1)), dimension_numbers=dn)
    v5 = jax.nn.relu(v4)
    v6 = jax.lax.conv_general_dilated(v5, params["w3"], (1, 1),
                                      ((1, 1), (1, 1)), dimension_numbers=dn)
    v6 = v6 + params["b3"]
    return jnp.transpose(v6, (0, 3, 1, 2))


if __name__ == "__main__":
    key = jax.random.PRNGKey(0)
    k1, k2, k3, k4, kx = jax.random.split(key, 5)

    # Deterministic synthetic parameters, stored HWIO (kh, kw, Cin, Cout).
    params = {
        "w1": 0.2 * jax.random.normal(k1, (1, 1, 3, 14), jnp.float32),
        "w2": 0.1 * jax.random.normal(k2, (2, 2, 14, 100), jnp.float32),
        "w3": 0.05 * jax.random.normal(k3, (2, 2, 100, 44), jnp.float32),
        "b3": 0.1 * jax.random.normal(k4, (44,), jnp.float32),
    }
    packed = prepare_params(params)   # packed once, outside the jitted forward

    # Input consistent with the module (Cin=3, 32x32 spatial), small batch.
    x = jax.random.normal(kx, (4, 3, 32, 32), jnp.float32)

    fwd = jax.jit(lambda xx: model_forward(xx, packed, block_n=2))
    out = jax.block_until_ready(fwd(x))

    ref = jax.block_until_ready(ref_forward(x, params))
    assert out.shape == (4, 44, 10, 10), out.shape
    assert jnp.allclose(out, ref, rtol=1e-3, atol=1e-3), \
        float(jnp.max(jnp.abs(out - ref)))

    print("KERNEL_OK")
</pallas_src>

<mosaic_0001>
module attributes {stable_mosaic.version = 11 : i64} {
  func.func @_fused_kernel(%arg0: i32, %arg1: memref<208x12xf32, #tpu.memory_space<vmem>>, %arg2: memref<12x56xf32, #tpu.memory_space<vmem>>, %arg3: memref<56x128xf32, #tpu.memory_space<vmem>>, %arg4: memref<128x512xf32, #tpu.memory_space<vmem>>, %arg5: memref<1x128xf32, #tpu.memory_space<vmem>>, %arg6: memref<208x128xf32, #tpu.memory_space<vmem>>) attributes {dimension_semantics = [#tpu.dimension_semantics<parallel>], iteration_bounds = array<i64: 2>, scalar_prefetch = 0 : i64, scratch_operands = 0 : i64, tpu.core_type = #tpu.core_type<tc>, window_params = [{transform_indices = @transform_0, window_bounds = array<i64: 208, 12>}, {pipeline_mode = #tpu.pipeline_mode<synchronous>, transform_indices = @transform_1, window_bounds = array<i64: 12, 56>}, {pipeline_mode = #tpu.pipeline_mode<synchronous>, transform_indices = @transform_2, window_bounds = array<i64: 56, 128>}, {pipeline_mode = #tpu.pipeline_mode<synchronous>, transform_indices = @transform_3, window_bounds = array<i64: 128, 512>}, {pipeline_mode = #tpu.pipeline_mode<synchronous>, transform_indices = @transform_4, window_bounds = array<i64: 1, 128>}, {transform_indices = @transform_5, window_bounds = array<i64: 208, 128>}]} {
    %c0 = arith.constant 0 : index
    %c0_0 = arith.constant 0 : index
    %0 = vector.load %arg1[%c0, %c0_0] : memref<208x12xf32, #tpu.memory_space<vmem>>, vector<208x12xf32>
    %c0_1 = arith.constant 0 : index
    %c0_2 = arith.constant 0 : index
    %1 = vector.load %arg2[%c0_1, %c0_2] : memref<12x56xf32, #tpu.memory_space<vmem>>, vector<12x56xf32>
    %cst = arith.constant dense<0.000000e+00> : vector<208x56xf32>
    %2 = tpu.matmul %0, %1, %cst {dimension_numbers = #tpu.dot_dimension_numbers<[1], [0], [0], [1], [0, 0, 1, 1], [], []>} : vector<208x12xf32>, vector<12x56xf32>, vector<208x56xf32> -> vector<208x56xf32>
    %cst_3 = arith.constant 0.000000e+00 : f32
    %3 = vector.broadcast %cst_3 : f32 to vector<208x56xf32>
    %4 = arith.maximumf %2, %3 : vector<208x56xf32>
    %c0_4 = arith.constant 0 : index
    %c0_5 = arith.constant 0 : index
    %5 = vector.load %arg3[%c0_4, %c0_5] : memref<56x128xf32, #tpu.memory_space<vmem>>, vector<56x128xf32>
    %cst_6 = arith.constant dense<0.000000e+00> : vector<208x128xf32>
    %6 = tpu.matmul %4, %5, %cst_6 {dimension_numbers = #tpu.dot_dimension_numbers<[1], [0], [0], [1], [0, 0, 1, 1], [], []>} : vector<208x56xf32>, vector<56x128xf32>, vector<208x128xf32> -> vector<208x128xf32>
    %cst_7 = arith.constant 0.000000e+00 : f32
    %7 = vector.broadcast %cst_7 : f32 to vector<208x128xf32>
    %8 = arith.maximumf %6, %7 : vector<208x128xf32>
    %c0_8 = arith.constant 0 : index
    %c0_9 = arith.constant 0 : index
    %9 = vector.load %arg4[%c0_8, %c0_9] : memref<128x512xf32, #tpu.memory_space<vmem>>, vector<128x512xf32>
    %cst_10 = arith.constant dense<0.000000e+00> : vector<208x512xf32>
    %10 = tpu.matmul %8, %9, %cst_10 {dimension_numbers = #tpu.dot_dimension_numbers<[1], [0], [0], [1], [0, 0, 1, 1], [], []>} : vector<208x128xf32>, vector<128x512xf32>, vector<208x512xf32> -> vector<208x512xf32>
    %11 = vector.extract_strided_slice %10 {offsets = [0, 384], sizes = [208, 128], strides = [1, 1]} : vector<208x512xf32> to vector<208x128xf32>
    %c0_11 = arith.constant 0 : index
    %c0_12 = arith.constant 0 : index
    %12 = vector.load %arg5[%c0_11, %c0_12] : memref<1x128xf32, #tpu.memory_space<vmem>>, vector<1x128xf32>
    %13 = vector.broadcast %12 : vector<1x128xf32> to vector<208x128xf32>
    %14 = arith.addf %11, %13 : vector<208x128xf32>
    %c0_13 = arith.constant 0 : index
    %c0_14 = arith.constant 0 : index
    %15 = vector.load %arg6[%c0_13, %c0_14] : memref<208x128xf32, #tpu.memory_space<vmem>>, vector<208x128xf32>
    tpu.vector_store %arg6[%c0_13, %c0_14], %14 {strides = array<i32>} : memref<208x128xf32, #tpu.memory_space<vmem>>, vector<208x128xf32>,
    %c1 = arith.constant 1 : index
    %c0_15 = arith.constant 0 : index
    %16 = vector.load %arg6[%c1, %c0_15] : memref<208x128xf32, #tpu.memory_space<vmem>>, vector<207x128xf32>
    %17 = vector.extract_strided_slice %10 {offsets = [0, 256], sizes = [207, 128], strides = [1, 1]} : vector<208x512xf32> to vector<207x128xf32>
    %18 = arith.addf %16, %17 : vector<207x128xf32>
    %c1_16 = arith.constant 1 : index
    %c0_17 = arith.constant 0 : index
    %19 = vector.load %arg6[%c1_16, %c0_17] : memref<208x128xf32, #tpu.memory_space<vmem>>, vector<207x128xf32>
    tpu.vector_store %arg6[%c1_16, %c0_17], %18 {strides = array<i32>} : memref<208x128xf32, #tpu.memory_space<vmem>>, vector<207x128xf32>,
    %c10 = arith.constant 10 : index
    %c0_18 = arith.constant 0 : index
    %20 = vector.load %arg6[%c10, %c0_18] : memref<208x128xf32, #tpu.memory_space<vmem>>, vector<198x128xf32>
    %21 = vector.extract_strided_slice %10 {offsets = [0, 128], sizes = [198, 128], strides = [1, 1]} : vector<208x512xf32> to vector<198x128xf32>
    %22 = arith.addf %20, %21 : vector<198x128xf32>
    %c10_19 = arith.constant 10 : index
    %c0_20 = arith.constant 0 : index
    %23 = vector.load %arg6[%c10_19, %c0_20] : memref<208x128xf32, #tpu.memory_space<vmem>>, vector<198x128xf32>
    tpu.vector_store %arg6[%c10_19, %c0_20], %22 {strides = array<i32>} : memref<208x128xf32, #tpu.memory_space<vmem>>, vector<198x128xf32>,
    %c11 = arith.constant 11 : index
    %c0_21 = arith.constant 0 : index
    %24 = vector.load %arg6[%c11, %c0_21] : memref<208x128xf32, #tpu.memory_space<vmem>>, vector<197x128xf32>
    %25 = vector.extract_strided_slice %10 {offsets = [0, 0], sizes = [197, 128], strides = [1, 1]} : vector<208x512xf32> to vector<197x128xf32>
    %26 = arith.addf %24, %25 : vector<197x128xf32>
    %c11_22 = arith.constant 11 : index
    %c0_23 = arith.constant 0 : index
    %27 = vector.load %arg6[%c11_22, %c0_23] : memref<208x128xf32, #tpu.memory_space<vmem>>, vector<197x128xf32>
    tpu.vector_store %arg6[%c11_22, %c0_23], %26 {strides = array<i32>} : memref<208x128xf32, #tpu.memory_space<vmem>>, vector<197x128xf32>,
    return
  }
  func.func @transform_0(%arg0: i32) -> (i32, i32) {
    %c0_i32 = arith.constant 0 : i32
    %c0_i32_0 = arith.constant 0 : i32
    return %arg0, %c0_i32 : i32, i32
  }
  func.func @transform_1(%arg0: i32) -> (i32, i32) {
    %c0_i32 = arith.constant 0 : i32
    %c0_i32_0 = arith.constant 0 : i32
    %c0_i32_1 = arith.constant 0 : i32
    return %c0_i32, %c0_i32_0 : i32, i32
  }
  func.func @transform_2(%arg0: i32) -> (i32, i32) {
    %c0_i32 = arith.constant 0 : i32
    %c0_i32_0 = arith.constant 0 : i32
    %c0_i32_1 = arith.constant 0 : i32
    return %c0_i32, %c0_i32_0 : i32, i32
  }
  func.func @transform_3(%arg0: i32) -> (i32, i32) {
    %c0_i32 = arith.constant 0 : i32
    %c0_i32_0 = arith.constant 0 : i32
    %c0_i32_1 = arith.constant 0 : i32
    return %c0_i32, %c0_i32_0 : i32, i32
  }
  func.func @transform_4(%arg0: i32) -> (i32, i32) {
    %c0_i32 = arith.constant 0 : i32
    %c0_i32_0 = arith.constant 0 : i32
    %c0_i32_1 = arith.constant 0 : i32
    return %c0_i32, %c0_i32_0 : i32, i32
  }
  func.func @transform_5(%arg0: i32) -> (i32, i32) {
    %c0_i32 = arith.constant 0 : i32
    %c0_i32_0 = arith.constant 0 : i32
    return %arg0, %c0_i32 : i32, i32
  }
}

</mosaic_0001>

<llo_original>
// kernel: _lambda_.1
$region0: #{_lambda_.1}
  #allocation0 [shape = 'u32[]', space=smem, size = 0x4, offset = 0x4, fixed_abs, tag = 'smem constant byte address 0x4 - core index']
  #allocation1 [shape = 'u32[144,128]{1,0:T(1,128)}', space=vmem, size = 0x12000, scoped, tag = 'internal scratch']
  %s0 = inlined_call_operand.vmem [shape: f32[416,12], index: 0, kind: input, shape index: {}]
  %s1 = inlined_call_operand.vmem [shape: f32[12,56], index: 1, kind: input, shape index: {}]
  %s2 = inlined_call_operand.vmem [shape: f32[56,128], index: 2, kind: input, shape index: {}]
  %s3 = inlined_call_operand.vmem [shape: f32[128,512], index: 3, kind: input, shape index: {}]
  %s4 = inlined_call_operand.vmem [shape: f32[1,128], index: 4, kind: input, shape index: {}]
  %s5 = inlined_call_operand.vmem [shape: f32[416,128], index: 5, kind: output, shape index: {}]
  %s6 = sld [smem:[#allocation0]]
  $region53: #{_lambda_.1} parent=0
    _
  %s8 = ssub.s32 1, %s6
  %s9 = scalar_select 0, %s8, %s6
  loop: start=0, step=1, limit=4
  $region2: #{_lambda_.1} parent=0 // loop_pre_header
    _
  $region3: #{_lambda_.1} parent=0 // loop_header
    %s11 = sphi 0, %s15
    %p12 = scmp.ge.s32.totalorder %s11, 4
    %s21 = sphi 0, %s23
    %s24 = sphi 0, %s21
    %s25 = sphi 0, %s24
    %s41 = sphi 0, %s25
    %s45 = sphi 0, %s45
    %s47 = sphi 0, %s45
    %s48 = sphi 0, %s47
    %s62 = sphi 0, %s48
    %s66 = sphi 0, %s66
    %s68 = sphi 0, %s66
    %s69 = sphi 0, %s68
    %s83 = sphi 0, %s69
    %s87 = sphi 0, %s87
    %s89 = sphi 0, %s87
    %s90 = sphi 0, %s89
    %s104 = sphi 0, %s90
    %s108 = sphi 0, %s108
    %s110 = sphi 0, %s108
    %s111 = sphi 0, %s110
    %s125 = sphi 0, %s111
    %s131 = sphi 0, %s133
    %s134 = sphi 0, %s131
    %s135 = sphi 0, %s134
    %s151 = sphi 0, %s135
  $region4: #{_lambda_.1} parent=0 // loop_header_branch
    %14 = sbr.rel (%p12) target = $region8
  $region5: #{_lambda_.1} parent=0 // loop_body
    %s16 = ssub.s32 %s11, 1
    %s17 = ssub.s32 %s11, 2
    %s18 = sadd.s32 %s11, 1
    %s19 = ssub.s32 %s11, %s18
    %p20 = scmp.eq.s32.totalorder %s19, 0
    %s22 = sadd.s32 %s21, 1
    %s23 = scalar_select %p20, %s21, %s22
    %p26 = pneg %p20
    %p27 = scmp.eq.s32.totalorder %s11, 1
    %p28 = por %p26, %p27
    %p29 = scmp.ne.s32.totalorder %s21, %s24
    %p30 = scmp.eq.s32.totalorder %s11, 0
    %p31 = por %p29, %p30
    %p32 = scmp.ne.s32.totalorder %s21, %s24
    %p33 = scmp.eq.s32.totalorder %s16, 1
    %p34 = por %p32, %p33
    %p35 = scmp.ne.s32.totalorder %s24, %s25
    %p36 = scmp.eq.s32.totalorder %s16, 0
    %p37 = por %p35, %p36
    %p38 = scmp.ne.s32.totalorder %s24, %s25
    %p39 = scmp.eq.s32.totalorder %s17, 1
    %p40 = por %p38, %p39
    %p42 = scmp.ne.s32.totalorder %s25, %s41
    %p43 = scmp.eq.s32.totalorder %s17, 0
    %p44 = por %p42, %p43
    %s46 = sadd.s32 %s45, 1
    %p49 = scmp.eq.s32.totalorder %s11, 1
    %p50 = scmp.ne.s32.totalorder %s45, %s47
    %p51 = scmp.eq.s32.totalorder %s11, 0
    %p52 = por %p50, %p51
    %p53 = scmp.ne.s32.totalorder %s45, %s47
    %p54 = scmp.eq.s32.totalorder %s16, 1
    %p55 = por %p53, %p54
    %p56 = scmp.ne.s32.totalorder %s47, %s48
    %p57 = scmp.eq.s32.totalorder %s16, 0
    %p58 = por %p56, %p57
    %p59 = scmp.ne.s32.totalorder %s47, %s48
    %p60 = scmp.eq.s32.totalorder %s17, 1
    %p61 = por %p59, %p60
    %p63 = scmp.ne.s32.totalorder %s48, %s62
    %p64 = scmp.eq.s32.totalorder %s17, 0
    %p65 = por %p63, %p64
    %s67 = sadd.s32 %s66, 1
    %p70 = scmp.eq.s32.totalorder %s11, 1
    %p71 = scmp.ne.s32.totalorder %s66, %s68
    %p72 = scmp.eq.s32.totalorder %s11, 0
    %p73 = por %p71, %p72
    %p74 = scmp.ne.s32.totalorder %s66, %s68
    %p75 = scmp.eq.s32.totalorder %s16, 1
    %p76 = por %p74, %p75
    %p77 = scmp.ne.s32.totalorder %s68, %s69
    %p78 = scmp.eq.s32.totalorder %s16, 0
    %p79 = por %p77, %p78
    %p80 = scmp.ne.s32.totalorder %s68, %s69
    %p81 = scmp.eq.s32.totalorder %s17, 1
    %p82 = por %p80, %p81
    %p84 = scmp.ne.s32.totalorder %s69, %s83
    %p85 = scmp.eq.s32.totalorder %s17, 0
    %p86 = por %p84, %p85
    %s88 = sadd.s32 %s87, 1
    %p91 = scmp.eq.s32.totalorder %s11, 1
    %p92 = scmp.ne.s32.totalorder %s87, %s89
    %p93 = scmp.eq.s32.totalorder %s11, 0
    %p94 = por %p92, %p93
    %p95 = scmp.ne.s32.totalorder %s87, %s89
    %p96 = scmp.eq.s32.totalorder %s16, 1
    %p97 = por %p95, %p96
    %p98 = scmp.ne.s32.totalorder %s89, %s90
    %p99 = scmp.eq.s32.totalorder %s16, 0
    %p100 = por %p98, %p99
    %p101 = scmp.ne.s32.totalorder %s89, %s90
    %p102 = scmp.eq.s32.totalorder %s17, 1
    %p103 = por %p101, %p102
    %p105 = scmp.ne.s32.totalorder %s90, %s104
    %p106 = scmp.eq.s32.totalorder %s17, 0
    %p107 = por %p105, %p106
    %s109 = sadd.s32 %s108, 1
    %p112 = scmp.eq.s32.totalorder %s11, 1
    %p113 = scmp.ne.s32.totalorder %s108, %s110
    %p114 = scmp.eq.s32.totalorder %s11, 0
    %p115 = por %p113, %p114
    %p116 = scmp.ne.s32.totalorder %s108, %s110
    %p117 = scmp.eq.s32.totalorder %s16, 1
    %p118 = por %p116, %p117
    %p119 = scmp.ne.s32.totalorder %s110, %s111
    %p120 = scmp.eq.s32.totalorder %s16, 0
    %p121 = por %p119, %p120
    %p122 = scmp.ne.s32.totalorder %s110, %s111
    %p123 = scmp.eq.s32.totalorder %s17, 1
    %p124 = por %p122, %p123
    %p126 = scmp.ne.s32.totalorder %s111, %s125
    %p127 = scmp.eq.s32.totalorder %s17, 0
    %p128 = por %p126, %p127
    %s129 = ssub.s32 %s11, %s18
    %p130 = scmp.eq.s32.totalorder %s129, 0
    %s132 = sadd.s32 %s131, 1
    %s133 = scalar_select %p130, %s131, %s132
    %p136 = pneg %p130
    %p137 = scmp.eq.s32.totalorder %s11, 1
    %p138 = por %p136, %p137
    %p139 = scmp.ne.s32.totalorder %s131, %s134
    %p140 = scmp.eq.s32.totalorder %s11, 0
    %p141 = por %p139, %p140
    %p142 = scmp.ne.s32.totalorder %s131, %s134
    %p143 = scmp.eq.s32.totalorder %s16, 1
    %p144 = por %p142, %p143
    %p145 = scmp.ne.s32.totalorder %s134, %s135
    %p146 = scmp.eq.s32.totalorder %s16, 0
    %p147 = por %p145, %p146
    %p148 = scmp.ne.s32.totalorder %s134, %s135
    %p149 = scmp.eq.s32.totalorder %s17, 1
    %p150 = por %p148, %p149
    %p152 = scmp.ne.s32.totalorder %s135, %s151
    %p153 = scmp.eq.s32.totalorder %s17, 0
    %p154 = por %p152, %p153
    %p155 = scmp.le.s32.totalorder 1, %s11
    %p156 = scmp.lt.s32.totalorder %s11, 3
    %p157 = pnand %p155, %p156
    %p158 = pneg %p157
    // Predicated region
    $region9: #{_lambda_.1} parent=5 // pred_check
      _
    $region10: #{_lambda_.1} parent=5 // pred_check_branch
      %160 = sbr.rel (%p157) target = $region12
    $region11: #{_lambda_.1} parent=5 // pred_region
      %s161 = ssub.s32 %s11, 1
      // Predicated region
      $region13: #{_lambda_.1} parent=11 // pred_check
        %p162 = pneg %p58
      $region14: #{_lambda_.1} parent=11 // pred_check_branch
        %164 = sbr.rel (%p162) target = $region16
      $region15: #{_lambda_.1} parent=11 // pred_region
        _
      $region16: #{_lambda_.1} parent=11 // pred_fallthru
        _
      // Predicated region
      $region17: #{_lambda_.1} parent=11 // pred_check
        %p165 = pneg %p79
      $region18: #{_lambda_.1} parent=11 // pred_check_branch
        %167 = sbr.rel (%p165) target = $region20
      $region19: #{_lambda_.1} parent=11 // pred_region
        _
      $region20: #{_lambda_.1} parent=11 // pred_fallthru
        _
      // Predicated region
      $region21: #{_lambda_.1} parent=11 // pred_check
        %p168 = pneg %p100
      $region22: #{_lambda_.1} parent=11 // pred_check_branch
        %170 = sbr.rel (%p168) target = $region24
      $region23: #{_lambda_.1} parent=11 // pred_region
        _
      $region24: #{_lambda_.1} parent=11 // pred_fallthru
        _
      // Predicated region
      $region25: #{_lambda_.1} parent=11 // pred_check
        %p171 = pneg %p121
      $region26: #{_lambda_.1} parent=11 // pred_check_branch
        %173 = sbr.rel (%p171) target = $region28
      $region27: #{_lambda_.1} parent=11 // pred_region
        _
      $region28: #{_lambda_.1} parent=11 // pred_fallthru
        _
    $region12: #{_lambda_.1} parent=5 // pred_fallthru
      _
    %p174 = scmp.lt.s32.totalorder %s11, 2
    // Predicated region
    $region29: #{_lambda_.1} parent=5 // pred_check
      %p175 = pneg %p174
    $region30: #{_lambda_.1} parent=5 // pred_check_branch
      %177 = sbr.rel (%p175) target = $region32
    $region31: #{_lambda_.1} parent=5 // pred_region
      // Predicated region
      $region33: #{_lambda_.1} parent=31 // pred_check
        %p178 = pneg %p31
      $region34: #{_lambda_.1} parent=31 // pred_check_branch
        %180 = sbr.rel (%p178) target = $region36
      $region35: #{_lambda_.1} parent=31 // pred_region
        %s181 = smul.u32 26, %s11
        %p182 = scmp.lt.s32.totalorder %s181, 51
        %s183 = scalar_select %p182, %s181, 51
        %s184 = smul.addr %s183, 8
        %s185 = scalar_lea.vmem %s0, %s184
        %s186 = smul.u32 26, %s11
      $region36: #{_lambda_.1} parent=31 // pred_fallthru
        _
    $region32: #{_lambda_.1} parent=5 // pred_fallthru
      _
    %p187 = scmp.le.s32.totalorder 1, %s11
    %p188 = scmp.lt.s32.totalorder %s11, 3
    %p189 = pnand %p187, %p188
    %p190 = pneg %p189
    // Predicated region
    $region37: #{_lambda_.1} parent=5 // pred_check
      _
    $region38: #{_lambda_.1} parent=5 // pred_check_branch
      %192 = sbr.rel (%p189) target = $region40
    $region39: #{_lambda_.1} parent=5 // pred_region
      %s193 = ssub.s32 %s11, 1
      %s194 = smul.u32 26, %s16
      %p195 = scmp.lt.s32.totalorder %s194, 51
      %s196 = scalar_select %p195, %s194, 51
      %s197 = smul.addr %s196, 8
      %s198 = scalar_lea.vmem %s0, %s197
      %p199 = pneg %p37
      %p200 = pneg %p34
      %p201 = pneg %p58
      %p202 = pneg %p55
      %p203 = pneg %p79
      %p204 = pneg %p76
      %p205 = pneg %p100
      %p206 = pneg %p97
      %p207 = pneg %p121
      %p208 = pneg %p118
      %p209 = pneg %p147
      %p210 = pneg %p144
      %s211 = smul.u32 26, %s16
      %p212 = scmp.lt.s32.totalorder %s211, 51
      %s213 = scalar_select %p212, %s211, 51
      %s214 = smul.addr %s213, 8
      %s215 = scalar_lea.vmem %s5, %s214
      %s216 = smul.u32 26, %s16
      %p217 = scmp.lt.s32.totalorder %s216, 51
      %s218 = scalar_select %p217, %s216, 51
      %s219 = smul.addr %s218, 8
      %s220 = scalar_lea.vmem %s0, %s219
      %s221 = smul.u32 26, %s16
      %s222 = smul.u32 26, %s16
      %p223 = scmp.lt.s32.totalorder %s222, 51
      %s224 = scalar_select %p223, %s222, 51
      %s225 = smul.addr %s224, 8
      %s226 = scalar_lea.vmem %s5, %s225
      %s227 = smul.u32 26, %s16
      %v228 = vld [vmem:[%s220] sm:$0xff]
      %v229 = vld [vmem:[%s220 + $0x8] sm:$0xff]
      %v230 = vld [vmem:[%s220 + $0x10] sm:$0xff]
      %v231 = vld [vmem:[%s220 + $0x18] sm:$0xff]
      %v232 = vld [vmem:[%s220 + $0x20] sm:$0xff]
      %v233 = vld [vmem:[%s220 + $0x28] sm:$0xff]
      %v234 = vld [vmem:[%s220 + $0x30] sm:$0xff]
      %v235 = vld [vmem:[%s220 + $0x38] sm:$0xff]
      %v236 = vld [vmem:[%s220 + $0x40] sm:$0xff]
      %v237 = vld [vmem:[%s220 + $0x48] sm:$0xff]
      %v238 = vld [vmem:[%s220 + $0x50] sm:$0xff]
      %v239 = vld [vmem:[%s220 + $0x58] sm:$0xff]
      %v240 = vld [vmem:[%s220 + $0x60] sm:$0xff]
      %v241 = vld [vmem:[%s220 + $0x68] sm:$0xff]
      %v242 = vld [vmem:[%s220 + $0x70] sm:$0xff]
      %v243 = vld [vmem:[%s220 + $0x78] sm:$0xff]
      %v244 = vld [vmem:[%s220 + $0x80] sm:$0xff]
      %v245 = vld [vmem:[%s220 + $0x88] sm:$0xff]
      %v246 = vld [vmem:[%s220 + $0x90] sm:$0xff]
      %v247 = vld [vmem:[%s220 + $0x98] sm:$0xff]
      %v248 = vld [vmem:[%s220 + $0xa0] sm:$0xff]
      %v249 = vld [vmem:[%s220 + $0xa8] sm:$0xff]
      %v250 = vld [vmem:[%s220 + $0xb0] sm:$0xff]
      %v251 = vld [vmem:[%s220 + $0xb8] sm:$0xff]
      %v252 = vld [vmem:[%s220 + $0xc0] sm:$0xff]
      %v253 = vld [vmem:[%s220 + $0xc8] sm:$0xff]
      %v254 = vld [vmem:[%s1] sm:$0xff]
      %v255 = vld [vmem:[%s1 + $0x8] sm:$0xf]
      %vm256 = vcmask 97280
      %v258 = vsel %vm256, %v228, 0
      %v261 = vsel %vm256, %v229, 0
      %v264 = vsel %vm256, %v230, 0
      %v267 = vsel %vm256, %v231, 0
      %v270 = vsel %vm256, %v232, 0
      %v273 = vsel %vm256, %v233, 0
      %v276 = vsel %vm256, %v234, 0
      %v279 = vsel %vm256, %v235, 0
      %v282 = vsel %vm256, %v236, 0
      %v285 = vsel %vm256, %v237, 0
      %v288 = vsel %vm256, %v238, 0
      %v291 = vsel %vm256, %v239, 0
      %v294 = vsel %vm256, %v240, 0
      %v297 = vsel %vm256, %v241, 0
      %v300 = vsel %vm256, %v242, 0
      %v303 = vsel %vm256, %v243, 0
      %v306 = vsel %vm256, %v244, 0
      %v309 = vsel %vm256, %v245, 0
      %v312 = vsel %vm256, %v246, 0
      %v315 = vsel %vm256, %v247, 0
      %v318 = vsel %vm256, %v248, 0
      %v321 = vsel %vm256, %v249, 0
      %v324 = vsel %vm256, %v250, 0
      %v327 = vsel %vm256, %v251, 0
      %v330 = vsel %vm256, %v252, 0
      %v333 = vsel %vm256, %v253, 0
      %vm335 = vcmask 1043456
      %v337 = vsel %vm335, %v255, 0
      %339 = vmatprep.subr.mxu0 0.0
      %340 = vmatpush1.msra.mxu0 0.0
      %341 = vmatprep.subr.mxu0 0.0
      %342 = vmatpush1.msra.mxu0 0.0
      %343 = vmatprep.subr.mxu0 0.0
      %344 = vmatpush1.msra.mxu0 0.0
      %345 = vmatprep.subr.mxu0 0.0
      %346 = vmatpush1.msra.mxu0 0.0
      %347 = vmatprep.subr.mxu0 0.0
      %348 = vmatpush1.msra.mxu0 0.0
      %349 = vmatprep.subr.mxu0 0.0
      %350 = vmatpush1.msra.mxu0 0.0
      %351 = vmatprep.subr.mxu0 0.0
      %352 = vmatpush1.msra.mxu0 0.0
      %353 = vmatprep.subr.mxu0 0.0
      %354 = vmatpush1.msra.mxu0 0.0
      %355 = vmatprep.subr.mxu0 0.0
      %356 = vmatpush1.msra.mxu0 0.0
      %357 = vmatprep.subr.mxu0 0.0
      %358 = vmatpush1.msra.mxu0 0.0
      %359 = vmatprep.subr.mxu0 0.0
      %360 = vmatpush1.msra.mxu0 0.0
      %361 = vmatprep.subr.mxu0 0.0
      %362 = vmatpush1.msra.mxu0 0.0
      %363 = vmatprep.subr.mxu0 0.0
      %364 = vmatpush1.msra.mxu0 0.0
      %365 = vmatprep.subr.mxu0 0.0
      %366 = vmatpush1.msra.mxu0 0.0
      %367 = vmatprep.subr.mxu0 0.0
      %368 = vmatpush1.msra.mxu0 %v337
      %369 = vmatprep.subr.mxu0 0.0
      %370 = vmatpush1.msra.mxu0 %v254
      %371 = vmatprep.subr.mxu0 0.0
      %372 = vmatpush2.msra.mxu0 0.0
      %373 = vmatprep.subr.mxu0 0.0
      %374 = vmatpush2.msra.mxu0 0.0
      %375 = vmatprep.subr.mxu0 0.0
      %376 = vmatpush2.msra.mxu0 0.0
      %377 = vmatprep.subr.mxu0 0.0
      %378 = vmatpush2.msra.mxu0 0.0
      %379 = vmatprep.subr.mxu0 0.0
      %380 = vmatpush2.msra.mxu0 0.0
      %381 = vmatprep.subr.mxu0 0.0
      %382 = vmatpush2.msra.mxu0 0.0
      %383 = vmatprep.subr.mxu0 0.0
      %384 = vmatpush2.msra.mxu0 0.0
      %385 = vmatprep.subr.mxu0 0.0
      %386 = vmatpush2.msra.mxu0 0.0
      %387 = vmatprep.subr.mxu0 0.0
      %388 = vmatpush2.msra.mxu0 0.0
      %389 = vmatprep.subr.mxu0 0.0
      %390 = vmatpush2.msra.mxu0 0.0
      %391 = vmatprep.subr.mxu0 0.0
      %392 = vmatpush2.msra.mxu0 0.0
      %393 = vmatprep.subr.mxu0 0.0
      %394 = vmatpush2.msra.mxu0 0.0
      %395 = vmatprep.subr.mxu0 0.0
      %396 = vmatpush2.msra.mxu0 0.0
      %397 = vmatprep.subr.mxu0 0.0
      %398 = vmatpush2.msra.mxu0 0.0
      %399 = vmatprep.subr.mxu0 0.0
      %400 = vmatpush2.msra.mxu0 0.0
      %401 = vmatprep.subr.mxu0 0.0
      %402 = vmatpush2.msra.mxu0 0.0
      %403 = vmatprep.mubr.f32.mxu0 0.0
      %404 = vmatmul.mubr.f32.gmra.mxu0 %v258
      %v405 = vpop.f32.mrf.mxu0
      %v406 = vadd.f32 0.0, %v405
      %v407 = vpop.f32.mrf.mxu0
      %408 = vmatprep.mubr.f32.mxu0 0.0
      %409 = vmatmul.mubr.f32.gmra.mxu0 %v261
      %v410 = vpop.f32.mrf.mxu0
      %v411 = vadd.f32 0.0, %v410
      %v412 = vpop.f32.mrf.mxu0
      %413 = vmatprep.mubr.f32.mxu0 0.0
      %414 = vmatmul.mubr.f32.gmra.mxu0 %v264
      %v415 = vpop.f32.mrf.mxu0
      %v416 = vadd.f32 0.0, %v415
      %v417 = vpop.f32.mrf.mxu0
      %418 = vmatprep.mubr.f32.mxu0 0.0
      %419 = vmatmul.mubr.f32.gmra.mxu0 %v267
      %v420 = vpop.f32.mrf.mxu0
      %v421 = vadd.f32 0.0, %v420
      %v422 = vpop.f32.mrf.mxu0
      %423 = vmatprep.mubr.f32.mxu0 0.0
      %424 = vmatmul.mubr.f32.gmra.mxu0 %v270
      %v425 = vpop.f32.mrf.mxu0
      %v426 = vadd.f32 0.0, %v425
      %v427 = vpop.f32.mrf.mxu0
      %428 = vmatprep.mubr.f32.mxu0 0.0
      %429 = vmatmul.mubr.f32.gmra.mxu0 %v273
      %v430 = vpop.f32.mrf.mxu0
      %v431 = vadd.f32 0.0, %v430
      %v432 = vpop.f32.mrf.mxu0
      %433 = vmatprep.mubr.f32.mxu0 0.0
      %434 = vmatmul.mubr.f32.gmra.mxu0 %v276
      %v435 = vpop.f32.mrf.mxu0
      %v436 = vadd.f32 0.0, %v435
      %v437 = vpop.f32.mrf.mxu0
      %438 = vmatprep.mubr.f32.mxu0 0.0
      %439 = vmatmul.mubr.f32.gmra.mxu0 %v279
      %v440 = vpop.f32.mrf.mxu0
      %v441 = vadd.f32 0.0, %v440
      %v442 = vpop.f32.mrf.mxu0
      %443 = vmatprep.mubr.f32.mxu0 0.0
      %444 = vmatmul.mubr.f32.gmra.mxu0 %v282
      %v445 = vpop.f32.mrf.mxu0
      %v446 = vadd.f32 0.0, %v445
      %v447 = vpop.f32.mrf.mxu0
      %448 = vmatprep.mubr.f32.mxu0 0.0
      %449 = vmatmul.mubr.f32.gmra.mxu0 %v285
      %v450 = vpop.f32.mrf.mxu0
      %v451 = vadd.f32 0.0, %v450
      %v452 = vpop.f32.mrf.mxu0
      %453 = vmatprep.mubr.f32.mxu0 0.0
      %454 = vmatmul.mubr.f32.gmra.mxu0 %v288
      %v455 = vpop.f32.mrf.mxu0
      %v456 = vadd.f32 0.0, %v455
      %v457 = vpop.f32.mrf.mxu0
      %458 = vmatprep.mubr.f32.mxu0 0.0
      %459 = vmatmul.mubr.f32.gmra.mxu0 %v291
      %v460 = vpop.f32.mrf.mxu0
      %v461 = vadd.f32 0.0, %v460
      %v462 = vpop.f32.mrf.mxu0
      %463 = vmatprep.mubr.f32.mxu0 0.0
      %464 = vmatmul.mubr.f32.gmra.mxu0 %v294
      %v465 = vpop.f32.mrf.mxu0
      %v466 = vadd.f32 0.0, %v465
      %v467 = vpop.f32.mrf.mxu0
      %468 = vmatprep.mubr.f32.mxu0 0.0
      %469 = vmatmul.mubr.f32.gmra.mxu0 %v297
      %v470 = vpop.f32.mrf.mxu0
      %v471 = vadd.f32 0.0, %v470
      %v472 = vpop.f32.mrf.mxu0
      %473 = vmatprep.mubr.f32.mxu0 0.0
      %474 = vmatmul.mubr.f32.gmra.mxu0 %v300
      %v475 = vpop.f32.mrf.mxu0
      %v476 = vadd.f32 0.0, %v475
      %v477 = vpop.f32.mrf.mxu0
      %478 = vmatprep.mubr.f32.mxu0 0.0
      %479 = vmatmul.mubr.f32.gmra.mxu0 %v303
      %v480 = vpop.f32.mrf.mxu0
      %v481 = vadd.f32 0.0, %v480
      %v482 = vpop.f32.mrf.mxu0
      %483 = vmatprep.mubr.f32.mxu0 0.0
      %484 = vmatmul.mubr.f32.gmra.mxu0 %v306
      %v485 = vpop.f32.mrf.mxu0
      %v486 = vadd.f32 0.0, %v485
      %v487 = vpop.f32.mrf.mxu0
      %488 = vmatprep.mubr.f32.mxu0 0.0
      %489 = vmatmul.mubr.f32.gmra.mxu0 %v309
      %v490 = vpop.f32.mrf.mxu0
      %v491 = vadd.f32 0.0, %v490
      %v492 = vpop.f32.mrf.mxu0
      %493 = vmatprep.mubr.f32.mxu0 0.0
      %494 = vmatmul.mubr.f32.gmra.mxu0 %v312
      %v495 = vpop.f32.mrf.mxu0
      %v496 = vadd.f32 0.0, %v495
      %v497 = vpop.f32.mrf.mxu0
      %498 = vmatprep.mubr.f32.mxu0 0.0
      %499 = vmatmul.mubr.f32.gmra.mxu0 %v315
      %v500 = vpop.f32.mrf.mxu0
      %v501 = vadd.f32 0.0, %v500
      %v502 = vpop.f32.mrf.mxu0
      %503 = vmatprep.mubr.f32.mxu0 0.0
      %504 = vmatmul.mubr.f32.gmra.mxu0 %v318
      %v505 = vpop.f32.mrf.mxu0
      %v506 = vadd.f32 0.0, %v505
      %v507 = vpop.f32.mrf.mxu0
      %508 = vmatprep.mubr.f32.mxu0 0.0
      %509 = vmatmul.mubr.f32.gmra.mxu0 %v321
      %v510 = vpop.f32.mrf.mxu0
      %v511 = vadd.f32 0.0, %v510
      %v512 = vpop.f32.mrf.mxu0
      %513 = vmatprep.mubr.f32.mxu0 0.0
      %514 = vmatmul.mubr.f32.gmra.mxu0 %v324
      %v515 = vpop.f32.mrf.mxu0
      %v516 = vadd.f32 0.0, %v515
      %v517 = vpop.f32.mrf.mxu0
      %518 = vmatprep.mubr.f32.mxu0 0.0
      %519 = vmatmul.mubr.f32.gmra.mxu0 %v327
      %v520 = vpop.f32.mrf.mxu0
      %v521 = vadd.f32 0.0, %v520
      %v522 = vpop.f32.mrf.mxu0
      %523 = vmatprep.mubr.f32.mxu0 0.0
      %524 = vmatmul.mubr.f32.gmra.mxu0 %v330
      %v525 = vpop.f32.mrf.mxu0
      %v526 = vadd.f32 0.0, %v525
      %v527 = vpop.f32.mrf.mxu0
      %528 = vmatprep.mubr.f32.mxu0 0.0
      %529 = vmatmul.mubr.f32.gmra.mxu0 %v333
      %v530 = vpop.f32.mrf.mxu0
      %v531 = vadd.f32 0.0, %v530
      %v532 = vpop.f32.mrf.mxu0
      %533 = vdwg.mxu0
      %v534 = vmax.f32 %v406, 0.0
      %v535 = vmax.f32 %v411, 0.0
      %v536 = vmax.f32 %v416, 0.0
      %v537 = vmax.f32 %v421, 0.0
      %v538 = vmax.f32 %v426, 0.0
      %v539 = vmax.f32 %v431, 0.0
      %v540 = vmax.f32 %v436, 0.0
      %v541 = vmax.f32 %v441, 0.0
      %v542 = vmax.f32 %v446, 0.0
      %v543 = vmax.f32 %v451, 0.0
      %v544 = vmax.f32 %v456, 0.0
      %v545 = vmax.f32 %v461, 0.0
      %v546 = vmax.f32 %v466, 0.0
      %v547 = vmax.f32 %v471, 0.0
      %v548 = vmax.f32 %v476, 0.0
      %v549 = vmax.f32 %v481, 0.0
      %v550 = vmax.f32 %v486, 0.0
      %v551 = vmax.f32 %v491, 0.0
      %v552 = vmax.f32 %v496, 0.0
      %v553 = vmax.f32 %v501, 0.0
      %v554 = vmax.f32 %v506, 0.0
      %v555 = vmax.f32 %v511, 0.0
      %v556 = vmax.f32 %v516, 0.0
      %v557 = vmax.f32 %v521, 0.0
      %v558 = vmax.f32 %v526, 0.0
      %v559 = vmax.f32 %v531, 0.0
      %v560 = vld [vmem:[%s2] sm:$0xff]
      %v561 = vld [vmem:[%s2 + $0x8] sm:$0xff]
      %v562 = vld [vmem:[%s2 + $0x10] sm:$0xff]
      %v563 = vld [vmem:[%s2 + $0x18] sm:$0xff]
      %v564 = vld [vmem:[%s2 + $0x20] sm:$0xff]
      %v565 = vld [vmem:[%s2 + $0x28] sm:$0xff]
      %v566 = vld [vmem:[%s2 + $0x30] sm:$0xff]
      %vm567 = vcmask 457728
      %v569 = vsel %vm567, %v534, 0
      %v572 = vsel %vm567, %v535, 0
      %v575 = vsel %vm567, %v536, 0
      %v578 = vsel %vm567, %v537, 0
      %v581 = vsel %vm567, %v538, 0
      %v584 = vsel %vm567, %v539, 0
      %v587 = vsel %vm567, %v540, 0
      %v590 = vsel %vm567, %v541, 0
      %v593 = vsel %vm567, %v542, 0
      %v596 = vsel %vm567, %v543, 0
      %v599 = vsel %vm567, %v544, 0
      %v602 = vsel %vm567, %v545, 0
      %v605 = vsel %vm567, %v546, 0
      %v608 = vsel %vm567, %v547, 0
      %v611 = vsel %vm567, %v548, 0
      %v614 = vsel %vm567, %v549, 0
      %v617 = vsel %vm567, %v550, 0
      %v620 = vsel %vm567, %v551, 0
      %v623 = vsel %vm567, %v552, 0
      %v626 = vsel %vm567, %v553, 0
      %v629 = vsel %vm567, %v554, 0
      %v632 = vsel %vm567, %v555, 0
      %v635 = vsel %vm567, %v556, 0
      %v638 = vsel %vm567, %v557, 0
      %v641 = vsel %vm567, %v558, 0
      %v644 = vsel %vm567, %v559, 0
      %646 = vmatprep.subr.mxu0 0.0
      %647 = vmatpush1.msra.mxu0 0.0
      %648 = vmatprep.subr.mxu0 0.0
      %649 = vmatpush1.msra.mxu0 0.0
      %650 = vmatprep.subr.mxu0 0.0
      %651 = vmatpush1.msra.mxu0 0.0
      %652 = vmatprep.subr.mxu0 0.0
      %653 = vmatpush1.msra.mxu0 0.0
      %654 = vmatprep.subr.mxu0 0.0
      %655 = vmatpush1.msra.mxu0 0.0
      %656 = vmatprep.subr.mxu0 0.0
      %657 = vmatpush1.msra.mxu0 0.0
      %658 = vmatprep.subr.mxu0 0.0
      %659 = vmatpush1.msra.mxu0 0.0
      %660 = vmatprep.subr.mxu0 0.0
      %661 = vmatpush1.msra.mxu0 0.0
      %662 = vmatprep.subr.mxu0 0.0
      %663 = vmatpush1.msra.mxu0 0.0
      %664 = vmatprep.subr.mxu0 0.0
      %665 = vmatpush1.msra.mxu0 %v566
      %666 = vmatprep.subr.mxu0 0.0
      %667 = vmatpush1.msra.mxu0 %v565
      %668 = vmatprep.subr.mxu0 0.0
      %669 = vmatpush1.msra.mxu0 %v564
      %670 = vmatprep.subr.mxu0 0.0
      %671 = vmatpush1.msra.mxu0 %v563
      %672 = vmatprep.subr.mxu0 0.0
      %673 = vmatpush1.msra.mxu0 %v562
      %674 = vmatprep.subr.mxu0 0.0
      %675 = vmatpush1.msra.mxu0 %v561
      %676 = vmatprep.subr.mxu0 0.0
      %677 = vmatpush1.msra.mxu0 %v560
      %678 = vmatprep.subr.mxu0 0.0
      %679 = vmatpush2.msra.mxu0 0.0
      %680 = vmatprep.subr.mxu0 0.0
      %681 = vmatpush2.msra.mxu0 0.0
      %682 = vmatprep.subr.mxu0 0.0
      %683 = vmatpush2.msra.mxu0 0.0
      %684 = vmatprep.subr.mxu0 0.0
      %685 = vmatpush2.msra.mxu0 0.0
      %686 = vmatprep.subr.mxu0 0.0
      %687 = vmatpush2.msra.mxu0 0.0
      %688 = vmatprep.subr.mxu0 0.0
      %689 = vmatpush2.msra.mxu0 0.0
      %690 = vmatprep.subr.mxu0 0.0
      %691 = vmatpush2.msra.mxu0 0.0
      %692 = vmatprep.subr.mxu0 0.0
      %693 = vmatpush2.msra.mxu0 0.0
      %694 = vmatprep.subr.mxu0 0.0
      %695 = vmatpush2.msra.mxu0 0.0
      %696 = vmatprep.subr.mxu0 0.0
      %697 = vmatpush2.msra.mxu0 0.0
      %698 = vmatprep.subr.mxu0 0.0
      %699 = vmatpush2.msra.mxu0 0.0
      %700 = vmatprep.subr.mxu0 0.0
      %701 = vmatpush2.msra.mxu0 0.0
      %702 = vmatprep.subr.mxu0 0.0
      %703 = vmatpush2.msra.mxu0 0.0
      %704 = vmatprep.subr.mxu0 0.0
      %705 = vmatpush2.msra.mxu0 0.0
      %706 = vmatprep.subr.mxu0 0.0
      %707 = vmatpush2.msra.mxu0 0.0
      %708 = vmatprep.subr.mxu0 0.0
      %709 = vmatpush2.msra.mxu0 0.0
      %710 = vmatprep.mubr.f32.mxu0 0.0
      %711 = vmatmul.mubr.f32.gmra.mxu0 %v569
      %v712 = vpop.f32.mrf.mxu0
      %v713 = vadd.f32 0.0, %v712
      %v714 = vpop.f32.mrf.mxu0
      %715 = vmatprep.mubr.f32.mxu0 0.0
      %716 = vmatmul.mubr.f32.gmra.mxu0 %v572
      %v717 = vpop.f32.mrf.mxu0
      %v718 = vadd.f32 0.0, %v717
      %v719 = vpop.f32.mrf.mxu0
      %720 = vmatprep.mubr.f32.mxu0 0.0
      %721 = vmatmul.mubr.f32.gmra.mxu0 %v575
      %v722 = vpop.f32.mrf.mxu0
      %v723 = vadd.f32 0.0, %v722
      %v724 = vpop.f32.mrf.mxu0
      %725 = vmatprep.mubr.f32.mxu0 0.0
      %726 = vmatmul.mubr.f32.gmra.mxu0 %v578
      %v727 = vpop.f32.mrf.mxu0
      %v728 = vadd.f32 0.0, %v727
      %v729 = vpop.f32.mrf.mxu0
      %730 = vmatprep.mubr.f32.mxu0 0.0
      %731 = vmatmul.mubr.f32.gmra.mxu0 %v581
      %v732 = vpop.f32.mrf.mxu0
      %v733 = vadd.f32 0.0, %v732
      %v734 = vpop.f32.mrf.mxu0
      %735 = vmatprep.mubr.f32.mxu0 0.0
      %736 = vmatmul.mubr.f32.gmra.mxu0 %v584
      %v737 = vpop.f32.mrf.mxu0
      %v738 = vadd.f32 0.0, %v737
      %v739 = vpop.f32.mrf.mxu0
      %740 = vmatprep.mubr.f32.mxu0 0.0
      %741 = vmatmul.mubr.f32.gmra.mxu0 %v587
      %v742 = vpop.f32.mrf.mxu0
      %v743 = vadd.f32 0.0, %v742
      %v744 = vpop.f32.mrf.mxu0
      %745 = vmatprep.mubr.f32.mxu0 0.0
      %746 = vmatmul.mubr.f32.gmra.mxu0 %v590
      %v747 = vpop.f32.mrf.mxu0
      %v748 = vadd.f32 0.0, %v747
      %v749 = vpop.f32.mrf.mxu0
      %750 = vmatprep.mubr.f32.mxu0 0.0
      %751 = vmatmul.mubr.f32.gmra.mxu0 %v593
      %v752 = vpop.f32.mrf.mxu0
      %v753 = vadd.f32 0.0, %v752
      %v754 = vpop.f32.mrf.mxu0
      %755 = vmatprep.mubr.f32.mxu0 0.0
      %756 = vmatmul.mubr.f32.gmra.mxu0 %v596
      %v757 = vpop.f32.mrf.mxu0
      %v758 = vadd.f32 0.0, %v757
      %v759 = vpop.f32.mrf.mxu0
      %760 = vmatprep.mubr.f32.mxu0 0.0
      %761 = vmatmul.mubr.f32.gmra.mxu0 %v599
      %v762 = vpop.f32.mrf.mxu0
      %v763 = vadd.f32 0.0, %v762
      %v764 = vpop.f32.mrf.mxu0
      %765 = vmatprep.mubr.f32.mxu0 0.0
      %766 = vmatmul.mubr.f32.gmra.mxu0 %v602
      %v767 = vpop.f32.mrf.mxu0
      %v768 = vadd.f32 0.0, %v767
      %v769 = vpop.f32.mrf.mxu0
      %770 = vmatprep.mubr.f32.mxu0 0.0
      %771 = vmatmul.mubr.f32.gmra.mxu0 %v605
      %v772 = vpop.f32.mrf.mxu0
      %v773 = vadd.f32 0.0, %v772
      %v774 = vpop.f32.mrf.mxu0
      %775 = vmatprep.mubr.f32.mxu0 0.0
      %776 = vmatmul.mubr.f32.gmra.mxu0 %v608
      %v777 = vpop.f32.mrf.mxu0
      %v778 = vadd.f32 0.0, %v777
      %v779 = vpop.f32.mrf.mxu0
      %780 = vmatprep.mubr.f32.mxu0 0.0
      %781 = vmatmul.mubr.f32.gmra.mxu0 %v611
      %v782 = vpop.f32.mrf.mxu0
      %v783 = vadd.f32 0.0, %v782
      %v784 = vpop.f32.mrf.mxu0
      %785 = vmatprep.mubr.f32.mxu0 0.0
      %786 = vmatmul.mubr.f32.gmra.mxu0 %v614
      %v787 = vpop.f32.mrf.mxu0
      %v788 = vadd.f32 0.0, %v787
      %v789 = vpop.f32.mrf.mxu0
      %790 = vmatprep.mubr.f32.mxu0 0.0
      %791 = vmatmul.mubr.f32.gmra.mxu0 %v617
      %v792 = vpop.f32.mrf.mxu0
      %v793 = vadd.f32 0.0, %v792
      %v794 = vpop.f32.mrf.mxu0
      %795 = vmatprep.mubr.f32.mxu0 0.0
      %796 = vmatmul.mubr.f32.gmra.mxu0 %v620
      %v797 = vpop.f32.mrf.mxu0
      %v798 = vadd.f32 0.0, %v797
      %v799 = vpop.f32.mrf.mxu0
      %800 = vmatprep.mubr.f32.mxu0 0.0
      %801 = vmatmul.mubr.f32.gmra.mxu0 %v623
      %v802 = vpop.f32.mrf.mxu0
      %v803 = vadd.f32 0.0, %v802
      %v804 = vpop.f32.mrf.mxu0
      %805 = vmatprep.mubr.f32.mxu0 0.0
      %806 = vmatmul.mubr.f32.gmra.mxu0 %v626
      %v807 = vpop.f32.mrf.mxu0
      %v808 = vadd.f32 0.0, %v807
      %v809 = vpop.f32.mrf.mxu0
      %810 = vmatprep.mubr.f32.mxu0 0.0
      %811 = vmatmul.mubr.f32.gmra.mxu0 %v629
      %v812 = vpop.f32.mrf.mxu0
      %v813 = vadd.f32 0.0, %v812
      %v814 = vpop.f32.mrf.mxu0
      %815 = vmatprep.mubr.f32.mxu0 0.0
      %816 = vmatmul.mubr.f32.gmra.mxu0 %v632
      %v817 = vpop.f32.mrf.mxu0
      %v818 = vadd.f32 0.0, %v817
      %v819 = vpop.f32.mrf.mxu0
      %820 = vmatprep.mubr.f32.mxu0 0.0
      %821 = vmatmul.mubr.f32.gmra.mxu0 %v635
      %v822 = vpop.f32.mrf.mxu0
      %v823 = vadd.f32 0.0, %v822
      %v824 = vpop.f32.mrf.mxu0
      %825 = vmatprep.mubr.f32.mxu0 0.0
      %826 = vmatmul.mubr.f32.gmra.mxu0 %v638
      %v827 = vpop.f32.mrf.mxu0
      %v828 = vadd.f32 0.0, %v827
      %v829 = vpop.f32.mrf.mxu0
      %830 = vmatprep.mubr.f32.mxu0 0.0
      %831 = vmatmul.mubr.f32.gmra.mxu0 %v641
      %v832 = vpop.f32.mrf.mxu0
      %v833 = vadd.f32 0.0, %v832
      %v834 = vpop.f32.mrf.mxu0
      %835 = vmatprep.mubr.f32.mxu0 0.0
      %836 = vmatmul.mubr.f32.gmra.mxu0 %v644
      %v837 = vpop.f32.mrf.mxu0
      %v838 = vadd.f32 0.0, %v837
      %v839 = vpop.f32.mrf.mxu0
      %840 = vdwg.mxu0
      %v841 = vmax.f32 %v713, 0.0
      %v842 = vmax.f32 %v718, 0.0
      %v843 = vmax.f32 %v723, 0.0
      %v844 = vmax.f32 %v728, 0.0
      %v845 = vmax.f32 %v733, 0.0
      %v846 = vmax.f32 %v738, 0.0
      %v847 = vmax.f32 %v743, 0.0
      %v848 = vmax.f32 %v748, 0.0
      %v849 = vmax.f32 %v753, 0.0
      %v850 = vmax.f32 %v758, 0.0
      %v851 = vmax.f32 %v763, 0.0
      %v852 = vmax.f32 %v768, 0.0
      %v853 = vmax.f32 %v773, 0.0
      %v854 = vmax.f32 %v778, 0.0
      %v855 = vmax.f32 %v783, 0.0
      %v856 = vmax.f32 %v788, 0.0
      %v857 = vmax.f32 %v793, 0.0
      %v858 = vmax.f32 %v798, 0.0
      %v859 = vmax.f32 %v803, 0.0
      %v860 = vmax.f32 %v808, 0.0
      %v861 = vmax.f32 %v813, 0.0
      %v862 = vmax.f32 %v818, 0.0
      %v863 = vmax.f32 %v823, 0.0
      %v864 = vmax.f32 %v828, 0.0
      %v865 = vmax.f32 %v833, 0.0
      %v866 = vmax.f32 %v838, 0.0
      %v867 = vld [vmem:[%s3] sm:$0xff]
      %v868 = vld [vmem:[%s3 + $0x8] sm:$0xff]
      %v869 = vld [vmem:[%s3 + $0x10] sm:$0xff]
      %v870 = vld [vmem:[%s3 + $0x18] sm:$0xff]
      %v871 = vld [vmem:[%s3 + $0x20] sm:$0xff]
      %v872 = vld [vmem:[%s3 + $0x28] sm:$0xff]
      %v873 = vld [vmem:[%s3 + $0x30] sm:$0xff]
      %v874 = vld [vmem:[%s3 + $0x38] sm:$0xff]
      %v875 = vld [vmem:[%s3 + $0x40] sm:$0xff]
      %v876 = vld [vmem:[%s3 + $0x48] sm:$0xff]
      %v877 = vld [vmem:[%s3 + $0x50] sm:$0xff]
      %v878 = vld [vmem:[%s3 + $0x58] sm:$0xff]
      %v879 = vld [vmem:[%s3 + $0x60] sm:$0xff]
      %v880 = vld [vmem:[%s3 + $0x68] sm:$0xff]
      %v881 = vld [vmem:[%s3 + $0x70] sm:$0xff]
      %v882 = vld [vmem:[%s3 + $0x78] sm:$0xff]
      %v883 = vld [vmem:[%s3 + $0x80] sm:$0xff]
      %v884 = vld [vmem:[%s3 + $0x88] sm:$0xff]
      %v885 = vld [vmem:[%s3 + $0x90] sm:$0xff]
      %v886 = vld [vmem:[%s3 + $0x98] sm:$0xff]
      %v887 = vld [vmem:[%s3 + $0xa0] sm:$0xff]
      %v888 = vld [vmem:[%s3 + $0xa8] sm:$0xff]
      %v889 = vld [vmem:[%s3 + $0xb0] sm:$0xff]
      %v890 = vld [vmem:[%s3 + $0xb8] sm:$0xff]
      %v891 = vld [vmem:[%s3 + $0xc0] sm:$0xff]
      %v892 = vld [vmem:[%s3 + $0xc8] sm:$0xff]
      %v893 = vld [vmem:[%s3 + $0xd0] sm:$0xff]
      %v894 = vld [vmem:[%s3 + $0xd8] sm:$0xff]
      %v895 = vld [vmem:[%s3 + $0xe0] sm:$0xff]
      %v896 = vld [vmem:[%s3 + $0xe8] sm:$0xff]
      %v897 = vld [vmem:[%s3 + $0xf0] sm:$0xff]
      %v898 = vld [vmem:[%s3 + $0xf8] sm:$0xff]
      %v899 = vld [vmem:[%s3 + $0x100] sm:$0xff]
      %v900 = vld [vmem:[%s3 + $0x108] sm:$0xff]
      %v901 = vld [vmem:[%s3 + $0x110] sm:$0xff]
      %v902 = vld [vmem:[%s3 + $0x118] sm:$0xff]
      %v903 = vld [vmem:[%s3 + $0x120] sm:$0xff]
      %v904 = vld [vmem:[%s3 + $0x128] sm:$0xff]
      %v905 = vld [vmem:[%s3 + $0x130] sm:$0xff]
      %v906 = vld [vmem:[%s3 + $0x138] sm:$0xff]
      %v907 = vld [vmem:[%s3 + $0x140] sm:$0xff]
      %v908 = vld [vmem:[%s3 + $0x148] sm:$0xff]
      %v909 = vld [vmem:[%s3 + $0x150] sm:$0xff]
      %v910 = vld [vmem:[%s3 + $0x158] sm:$0xff]
      %v911 = vld [vmem:[%s3 + $0x160] sm:$0xff]
      %v912 = vld [vmem:[%s3 + $0x168] sm:$0xff]
      %v913 = vld [vmem:[%s3 + $0x170] sm:$0xff]
      %v914 = vld [vmem:[%s3 + $0x178] sm:$0xff]
      %v915 = vld [vmem:[%s3 + $0x180] sm:$0xff]
      %v916 = vld [vmem:[%s3 + $0x188] sm:$0xff]
      %v917 = vld [vmem:[%s3 + $0x190] sm:$0xff]
      %v918 = vld [vmem:[%s3 + $0x198] sm:$0xff]
      %v919 = vld [vmem:[%s3 + $0x1a0] sm:$0xff]
      %v920 = vld [vmem:[%s3 + $0x1a8] sm:$0xff]
      %v921 = vld [vmem:[%s3 + $0x1b0] sm:$0xff]
      %v922 = vld [vmem:[%s3 + $0x1b8] sm:$0xff]
      %v923 = vld [vmem:[%s3 + $0x1c0] sm:$0xff]
      %v924 = vld [vmem:[%s3 + $0x1c8] sm:$0xff]
      %v925 = vld [vmem:[%s3 + $0x1d0] sm:$0xff]
      %v926 = vld [vmem:[%s3 + $0x1d8] sm:$0xff]
      %v927 = vld [vmem:[%s3 + $0x1e0] sm:$0xff]
      %v928 = vld [vmem:[%s3 + $0x1e8] sm:$0xff]
      %v929 = vld [vmem:[%s3 + $0x1f0] sm:$0xff]
      %v930 = vld [vmem:[%s3 + $0x1f8] sm:$0xff]
      %931 = vmatprep.subr.mxu0 %v928
      %932 = vmatpush1.msra.mxu0 %v927
      %933 = vmatprep.subr.mxu0 %v924
      %934 = vmatpush1.msra.mxu0 %v923
      %935 = vmatprep.subr.mxu0 %v920
      %936 = vmatpush1.msra.mxu0 %v919
      %937 = vmatprep.subr.mxu0 %v916
      %938 = vmatpush1.msra.mxu0 %v915
      %939 = vmatprep.subr.mxu0 %v912
      %940 = vmatpush1.msra.mxu0 %v911
      %941 = vmatprep.subr.mxu0 %v908
      %942 = vmatpush1.msra.mxu0 %v907
      %943 = vmatprep.subr.mxu0 %v904
      %944 = vmatpush1.msra.mxu0 %v903
      %945 = vmatprep.subr.mxu0 %v900
      %946 = vmatpush1.msra.mxu0 %v899
      %947 = vmatprep.subr.mxu0 %v896
      %948 = vmatpush1.msra.mxu0 %v895
      %949 = vmatprep.subr.mxu0 %v892
      %950 = vmatpush1.msra.mxu0 %v891
      %951 = vmatprep.subr.mxu0 %v888
      %952 = vmatpush1.msra.mxu0 %v887
      %953 = vmatprep.subr.mxu0 %v884
      %954 = vmatpush1.msra.mxu0 %v883
      %955 = vmatprep.subr.mxu0 %v880
      %956 = vmatpush1.msra.mxu0 %v879
      %957 = vmatprep.subr.mxu0 %v876
      %958 = vmatpush1.msra.mxu0 %v875
      %959 = vmatprep.subr.mxu0 %v872
      %960 = vmatpush1.msra.mxu0 %v871
      %961 = vmatprep.subr.mxu0 %v868
      %962 = vmatpush1.msra.mxu0 %v867
      %963 = vmatprep.subr.mxu0 0.0
      %964 = vmatpush2.msra.mxu0 0.0
      %965 = vmatprep.subr.mxu0 0.0
      %966 = vmatpush2.msra.mxu0 0.0
      %967 = vmatprep.subr.mxu0 0.0
      %968 = vmatpush2.msra.mxu0 0.0
      %969 = vmatprep.subr.mxu0 0.0
      %970 = vmatpush2.msra.mxu0 0.0
      %971 = vmatprep.subr.mxu0 0.0
      %972 = vmatpush2.msra.mxu0 0.0
      %973 = vmatprep.subr.mxu0 0.0
      %974 = vmatpush2.msra.mxu0 0.0
      %975 = vmatprep.subr.mxu0 0.0
      %976 = vmatpush2.msra.mxu0 0.0
      %977 = vmatprep.subr.mxu0 0.0
      %978 = vmatpush2.msra.mxu0 0.0
      %979 = vmatprep.subr.mxu0 0.0
      %980 = vmatpush2.msra.mxu0 0.0
      %981 = vmatprep.subr.mxu0 0.0
      %982 = vmatpush2.msra.mxu0 0.0
      %983 = vmatprep.subr.mxu0 0.0
      %984 = vmatpush2.msra.mxu0 0.0
      %985 = vmatprep.subr.mxu0 0.0
      %986 = vmatpush2.msra.mxu0 0.0
      %987 = vmatprep.subr.mxu0 0.0
      %988 = vmatpush2.msra.mxu0 0.0
      %989 = vmatprep.subr.mxu0 0.0
      %990 = vmatpush2.msra.mxu0 0.0
      %991 = vmatprep.subr.mxu0 0.0
      %992 = vmatpush2.msra.mxu0 0.0
      %993 = vmatprep.subr.mxu0 0.0
      %994 = vmatpush2.msra.mxu0 0.0
      %995 = vmatprep.mubr.f32.mxu0 0.0
      %996 = vmatmul.mubr.f32.gmra.mxu0 %v841
      %v997 = vpop.f32.mrf.mxu0
      %v998 = vadd.f32 0.0, %v997
      %v999 = vpop.f32.mrf.mxu0
      %v1000 = vadd.f32 0.0, %v999
      %1001 = vmatprep.mubr.f32.mxu0 0.0
      %1002 = vmatmul.mubr.f32.gmra.mxu0 %v842
      %v1003 = vpop.f32.mrf.mxu0
      %v1004 = vadd.f32 0.0, %v1003
      %v1005 = vpop.f32.mrf.mxu0
      %v1006 = vadd.f32 0.0, %v1005
      %1007 = vmatprep.mubr.f32.mxu0 0.0
      %1008 = vmatmul.mubr.f32.gmra.mxu0 %v843
      %v1009 = vpop.f32.mrf.mxu0
      %v1010 = vadd.f32 0.0, %v1009
      %v1011 = vpop.f32.mrf.mxu0
      %v1012 = vadd.f32 0.0, %v1011
      %1013 = vmatprep.mubr.f32.mxu0 0.0
      %1014 = vmatmul.mubr.f32.gmra.mxu0 %v844
      %v1015 = vpop.f32.mrf.mxu0
      %v1016 = vadd.f32 0.0, %v1015
      %v1017 = vpop.f32.mrf.mxu0
      %v1018 = vadd.f32 0.0, %v1017
      %1019 = vmatprep.mubr.f32.mxu0 0.0
      %1020 = vmatmul.mubr.f32.gmra.mxu0 %v845
      %v1021 = vpop.f32.mrf.mxu0
      %v1022 = vadd.f32 0.0, %v1021
      %v1023 = vpop.f32.mrf.mxu0
      %v1024 = vadd.f32 0.0, %v1023
      %1025 = vmatprep.mubr.f32.mxu0 0.0
      %1026 = vmatmul.mubr.f32.gmra.mxu0 %v846
      %v1027 = vpop.f32.mrf.mxu0
      %v1028 = vadd.f32 0.0, %v1027
      %v1029 = vpop.f32.mrf.mxu0
      %v1030 = vadd.f32 0.0, %v1029
      %1031 = vmatprep.mubr.f32.mxu0 0.0
      %1032 = vmatmul.mubr.f32.gmra.mxu0 %v847
      %v1033 = vpop.f32.mrf.mxu0
      %v1034 = vadd.f32 0.0, %v1033
      %v1035 = vpop.f32.mrf.mxu0
      %v1036 = vadd.f32 0.0, %v1035
      %1037 = vmatprep.mubr.f32.mxu0 0.0
      %1038 = vmatmul.mubr.f32.gmra.mxu0 %v848
      %v1039 = vpop.f32.mrf.mxu0
      %v1040 = vadd.f32 0.0, %v1039
      %v1041 = vpop.f32.mrf.mxu0
      %v1042 = vadd.f32 0.0, %v1041
      %1043 = vmatprep.mubr.f32.mxu0 0.0
      %1044 = vmatmul.mubr.f32.gmra.mxu0 %v849
      %v1045 = vpop.f32.mrf.mxu0
      %v1046 = vadd.f32 0.0, %v1045
      %v1047 = vpop.f32.mrf.mxu0
      %v1048 = vadd.f32 0.0, %v1047
      %1049 = vmatprep.mubr.f32.mxu0 0.0
      %1050 = vmatmul.mubr.f32.gmra.mxu0 %v850
      %v1051 = vpop.f32.mrf.mxu0
      %v1052 = vadd.f32 0.0, %v1051
      %v1053 = vpop.f32.mrf.mxu0
      %v1054 = vadd.f32 0.0, %v1053
      %1055 = vmatprep.mubr.f32.mxu0 0.0
      %1056 = vmatmul.mubr.f32.gmra.mxu0 %v851
      %v1057 = vpop.f32.mrf.mxu0
      %v1058 = vadd.f32 0.0, %v1057
      %v1059 = vpop.f32.mrf.mxu0
      %v1060 = vadd.f32 0.0, %v1059
      %1061 = vmatprep.mubr.f32.mxu0 0.0
      %1062 = vmatmul.mubr.f32.gmra.mxu0 %v852
      %v1063 = vpop.f32.mrf.mxu0
      %v1064 = vadd.f32 0.0, %v1063
      %v1065 = vpop.f32.mrf.mxu0
      %v1066 = vadd.f32 0.0, %v1065
      %1067 = vmatprep.mubr.f32.mxu0 0.0
      %1068 = vmatmul.mubr.f32.gmra.mxu0 %v853
      %v1069 = vpop.f32.mrf.mxu0
      %v1070 = vadd.f32 0.0, %v1069
      %v1071 = vpop.f32.mrf.mxu0
      %v1072 = vadd.f32 0.0, %v1071
      %1073 = vmatprep.mubr.f32.mxu0 0.0
      %1074 = vmatmul.mubr.f32.gmra.mxu0 %v854
      %v1075 = vpop.f32.mrf.mxu0
      %v1076 = vadd.f32 0.0, %v1075
      %v1077 = vpop.f32.mrf.mxu0
      %v1078 = vadd.f32 0.0, %v1077
      %1079 = vmatprep.mubr.f32.mxu0 0.0
      %1080 = vmatmul.mubr.f32.gmra.mxu0 %v855
      %v1081 = vpop.f32.mrf.mxu0
      %v1082 = vadd.f32 0.0, %v1081
      %v1083 = vpop.f32.mrf.mxu0
      %v1084 = vadd.f32 0.0, %v1083
      %1085 = vmatprep.mubr.f32.mxu0 0.0
      %1086 = vmatmul.mubr.f32.gmra.mxu0 %v856
      %v1087 = vpop.f32.mrf.mxu0
      %v1088 = vadd.f32 0.0, %v1087
      %v1089 = vpop.f32.mrf.mxu0
      %v1090 = vadd.f32 0.0, %v1089
      %1091 = vmatprep.mubr.f32.mxu0 0.0
      %1092 = vmatmul.mubr.f32.gmra.mxu0 %v857
      %v1093 = vpop.f32.mrf.mxu0
      %v1094 = vadd.f32 0.0, %v1093
      %v1095 = vpop.f32.mrf.mxu0
      %v1096 = vadd.f32 0.0, %v1095
      %1097 = vmatprep.mubr.f32.mxu0 0.0
      %1098 = vmatmul.mubr.f32.gmra.mxu0 %v858
      %v1099 = vpop.f32.mrf.mxu0
      %v1100 = vadd.f32 0.0, %v1099
      %v1101 = vpop.f32.mrf.mxu0
      %v1102 = vadd.f32 0.0, %v1101
      %1103 = vmatprep.mubr.f32.mxu0 0.0
      %1104 = vmatmul.mubr.f32.gmra.mxu0 %v859
      %v1105 = vpop.f32.mrf.mxu0
      %v1106 = vadd.f32 0.0, %v1105
      %v1107 = vpop.f32.mrf.mxu0
      %v1108 = vadd.f32 0.0, %v1107
      %1109 = vmatprep.mubr.f32.mxu0 0.0
      %1110 = vmatmul.mubr.f32.gmra.mxu0 %v860
      %v1111 = vpop.f32.mrf.mxu0
      %v1112 = vadd.f32 0.0, %v1111
      %v1113 = vpop.f32.mrf.mxu0
      %v1114 = vadd.f32 0.0, %v1113
      %1115 = vmatprep.mubr.f32.mxu0 0.0
      %1116 = vmatmul.mubr.f32.gmra.mxu0 %v861
      %v1117 = vpop.f32.mrf.mxu0
      %v1118 = vadd.f32 0.0, %v1117
      %v1119 = vpop.f32.mrf.mxu0
      %v1120 = vadd.f32 0.0, %v1119
      %1121 = vmatprep.mubr.f32.mxu0 0.0
      %1122 = vmatmul.mubr.f32.gmra.mxu0 %v862
      %v1123 = vpop.f32.mrf.mxu0
      %v1124 = vadd.f32 0.0, %v1123
      %v1125 = vpop.f32.mrf.mxu0
      %v1126 = vadd.f32 0.0, %v1125
      %1127 = vmatprep.mubr.f32.mxu0 0.0
      %1128 = vmatmul.mubr.f32.gmra.mxu0 %v863
      %v1129 = vpop.f32.mrf.mxu0
      %v1130 = vadd.f32 0.0, %v1129
      %v1131 = vpop.f32.mrf.mxu0
      %v1132 = vadd.f32 0.0, %v1131
      %1133 = vmatprep.mubr.f32.mxu0 0.0
      %1134 = vmatmul.mubr.f32.gmra.mxu0 %v864
      %v1135 = vpop.f32.mrf.mxu0
      %v1136 = vadd.f32 0.0, %v1135
      %v1137 = vpop.f32.mrf.mxu0
      %v1138 = vadd.f32 0.0, %v1137
      %1139 = vmatprep.mubr.f32.mxu0 0.0
      %1140 = vmatmul.mubr.f32.gmra.mxu0 %v865
      %v1141 = vpop.f32.mrf.mxu0
      %v1142 = vadd.f32 0.0, %v1141
      %v1143 = vpop.f32.mrf.mxu0
      %v1144 = vadd.f32 0.0, %v1143
      %1145 = vmatprep.mubr.f32.mxu0 0.0
      %1146 = vmatmul.mubr.f32.gmra.mxu0 %v866
      %v1147 = vpop.f32.mrf.mxu0
      %v1148 = vpop.f32.mrf.mxu0
      %1149 = vdwg.mxu0
      %1150 = vmatprep.subr.mxu0 %v930
      %1151 = vmatpush1.msra.mxu0 %v929
      %1152 = vmatprep.subr.mxu0 %v926
      %1153 = vmatpush1.msra.mxu0 %v925
      %1154 = vmatprep.subr.mxu0 %v922
      %1155 = vmatpush1.msra.mxu0 %v921
      %1156 = vmatprep.subr.mxu0 %v918
      %1157 = vmatpush1.msra.mxu0 %v917
      %1158 = vmatprep.subr.mxu0 %v914
      %1159 = vmatpush1.msra.mxu0 %v913
      %1160 = vmatprep.subr.mxu0 %v910
      %1161 = vmatpush1.msra.mxu0 %v909
      %1162 = vmatprep.subr.mxu0 %v906
      %1163 = vmatpush1.msra.mxu0 %v905
      %1164 = vmatprep.subr.mxu0 %v902
      %1165 = vmatpush1.msra.mxu0 %v901
      %1166 = vmatprep.subr.mxu0 %v898
      %1167 = vmatpush1.msra.mxu0 %v897
      %1168 = vmatprep.subr.mxu0 %v894
      %1169 = vmatpush1.msra.mxu0 %v893
      %1170 = vmatprep.subr.mxu0 %v890
      %1171 = vmatpush1.msra.mxu0 %v889
      %1172 = vmatprep.subr.mxu0 %v886
      %1173 = vmatpush1.msra.mxu0 %v885
      %1174 = vmatprep.subr.mxu0 %v882
      %1175 = vmatpush1.msra.mxu0 %v881
      %1176 = vmatprep.subr.mxu0 %v878
      %1177 = vmatpush1.msra.mxu0 %v877
      %1178 = vmatprep.subr.mxu0 %v874
      %1179 = vmatpush1.msra.mxu0 %v873
      %1180 = vmatprep.subr.mxu0 %v870
      %1181 = vmatpush1.msra.mxu0 %v869
      %1182 = vmatprep.subr.mxu0 0.0
      %1183 = vmatpush2.msra.mxu0 0.0
      %1184 = vmatprep.subr.mxu0 0.0
      %1185 = vmatpush2.msra.mxu0 0.0
      %1186 = vmatprep.subr.mxu0 0.0
      %1187 = vmatpush2.msra.mxu0 0.0
      %1188 = vmatprep.subr.mxu0 0.0
      %1189 = vmatpush2.msra.mxu0 0.0
      %1190 = vmatprep.subr.mxu0 0.0
      %1191 = vmatpush2.msra.mxu0 0.0
      %1192 = vmatprep.subr.mxu0 0.0
      %1193 = vmatpush2.msra.mxu0 0.0
      %1194 = vmatprep.subr.mxu0 0.0
      %1195 = vmatpush2.msra.mxu0 0.0
      %1196 = vmatprep.subr.mxu0 0.0
      %1197 = vmatpush2.msra.mxu0 0.0
      %1198 = vmatprep.subr.mxu0 0.0
      %1199 = vmatpush2.msra.mxu0 0.0
      %1200 = vmatprep.subr.mxu0 0.0
      %1201 = vmatpush2.msra.mxu0 0.0
      %1202 = vmatprep.subr.mxu0 0.0
      %1203 = vmatpush2.msra.mxu0 0.0
      %1204 = vmatprep.subr.mxu0 0.0
      %1205 = vmatpush2.msra.mxu0 0.0
      %1206 = vmatprep.subr.mxu0 0.0
      %1207 = vmatpush2.msra.mxu0 0.0
      %1208 = vmatprep.subr.mxu0 0.0
      %1209 = vmatpush2.msra.mxu0 0.0
      %1210 = vmatprep.subr.mxu0 0.0
      %1211 = vmatpush2.msra.mxu0 0.0
      %1212 = vmatprep.subr.mxu0 0.0
      %1213 = vmatpush2.msra.mxu0 0.0
      %1214 = vmatprep.mubr.f32.mxu0 0.0
      %1215 = vmatmul.mubr.f32.gmra.mxu0 %v841
      %v1216 = vpop.f32.mrf.mxu0
      %v1217 = vadd.f32 0.0, %v1216
      %v1218 = vpop.f32.mrf.mxu0
      %v1219 = vadd.f32 0.0, %v1218
      %1220 = vmatprep.mubr.f32.mxu0 0.0
      %1221 = vmatmul.mubr.f32.gmra.mxu0 %v842
      %v1222 = vpop.f32.mrf.mxu0
      %v1223 = vadd.f32 0.0, %v1222
      %v1224 = vpop.f32.mrf.mxu0
      %v1225 = vadd.f32 0.0, %v1224
      %1226 = vmatprep.mubr.f32.mxu0 0.0
      %1227 = vmatmul.mubr.f32.gmra.mxu0 %v843
      %v1228 = vpop.f32.mrf.mxu0
      %v1229 = vadd.f32 0.0, %v1228
      %v1230 = vpop.f32.mrf.mxu0
      %v1231 = vadd.f32 0.0, %v1230
      %1232 = vmatprep.mubr.f32.mxu0 0.0
      %1233 = vmatmul.mubr.f32.gmra.mxu0 %v844
      %v1234 = vpop.f32.mrf.mxu0
      %v1235 = vadd.f32 0.0, %v1234
      %v1236 = vpop.f32.mrf.mxu0
      %v1237 = vadd.f32 0.0, %v1236
      %1238 = vmatprep.mubr.f32.mxu0 0.0
      %1239 = vmatmul.mubr.f32.gmra.mxu0 %v845
      %v1240 = vpop.f32.mrf.mxu0
      %v1241 = vadd.f32 0.0, %v1240
      %v1242 = vpop.f32.mrf.mxu0
      %v1243 = vadd.f32 0.0, %v1242
      %1244 = vmatprep.mubr.f32.mxu0 0.0
      %1245 = vmatmul.mubr.f32.gmra.mxu0 %v846
      %v1246 = vpop.f32.mrf.mxu0
      %v1247 = vadd.f32 0.0, %v1246
      %v1248 = vpop.f32.mrf.mxu0
      %v1249 = vadd.f32 0.0, %v1248
      %1250 = vmatprep.mubr.f32.mxu0 0.0
      %1251 = vmatmul.mubr.f32.gmra.mxu0 %v847
      %v1252 = vpop.f32.mrf.mxu0
      %v1253 = vadd.f32 0.0, %v1252
      %v1254 = vpop.f32.mrf.mxu0
      %v1255 = vadd.f32 0.0, %v1254
      %1256 = vmatprep.mubr.f32.mxu0 0.0
      %1257 = vmatmul.mubr.f32.gmra.mxu0 %v848
      %v1258 = vpop.f32.mrf.mxu0
      %v1259 = vadd.f32 0.0, %v1258
      %v1260 = vpop.f32.mrf.mxu0
      %v1261 = vadd.f32 0.0, %v1260
      %1262 = vmatprep.mubr.f32.mxu0 0.0
      %1263 = vmatmul.mubr.f32.gmra.mxu0 %v849
      %v1264 = vpop.f32.mrf.mxu0
      %v1265 = vadd.f32 0.0, %v1264
      %v1266 = vpop.f32.mrf.mxu0
      %v1267 = vadd.f32 0.0, %v1266
      %1268 = vmatprep.mubr.f32.mxu0 0.0
      %1269 = vmatmul.mubr.f32.gmra.mxu0 %v850
      %v1270 = vpop.f32.mrf.mxu0
      %v1271 = vadd.f32 0.0, %v1270
      %v1272 = vpop.f32.mrf.mxu0
      %v1273 = vadd.f32 0.0, %v1272
      %1274 = vmatprep.mubr.f32.mxu0 0.0
      %1275 = vmatmul.mubr.f32.gmra.mxu0 %v851
      %v1276 = vpop.f32.mrf.mxu0
      %v1277 = vadd.f32 0.0, %v1276
      %v1278 = vpop.f32.mrf.mxu0
      %v1279 = vadd.f32 0.0, %v1278
      %1280 = vmatprep.mubr.f32.mxu0 0.0
      %1281 = vmatmul.mubr.f32.gmra.mxu0 %v852
      %v1282 = vpop.f32.mrf.mxu0
      %v1283 = vadd.f32 0.0, %v1282
      %v1284 = vpop.f32.mrf.mxu0
      %v1285 = vadd.f32 0.0, %v1284
      %1286 = vmatprep.mubr.f32.mxu0 0.0
      %1287 = vmatmul.mubr.f32.gmra.mxu0 %v853
      %v1288 = vpop.f32.mrf.mxu0
      %v1289 = vadd.f32 0.0, %v1288
      %v1290 = vpop.f32.mrf.mxu0
      %v1291 = vadd.f32 0.0, %v1290
      %1292 = vmatprep.mubr.f32.mxu0 0.0
      %1293 = vmatmul.mubr.f32.gmra.mxu0 %v854
      %v1294 = vpop.f32.mrf.mxu0
      %v1295 = vadd.f32 0.0, %v1294
      %v1296 = vpop.f32.mrf.mxu0
      %v1297 = vadd.f32 0.0, %v1296
      %1298 = vmatprep.mubr.f32.mxu0 0.0
      %1299 = vmatmul.mubr.f32.gmra.mxu0 %v855
      %v1300 = vpop.f32.mrf.mxu0
      %v1301 = vadd.f32 0.0, %v1300
      %v1302 = vpop.f32.mrf.mxu0
      %v1303 = vadd.f32 0.0, %v1302
      %1304 = vmatprep.mubr.f32.mxu0 0.0
      %1305 = vmatmul.mubr.f32.gmra.mxu0 %v856
      %v1306 = vpop.f32.mrf.mxu0
      %v1307 = vadd.f32 0.0, %v1306
      %v1308 = vpop.f32.mrf.mxu0
      %v1309 = vadd.f32 0.0, %v1308
      %1310 = vmatprep.mubr.f32.mxu0 0.0
      %1311 = vmatmul.mubr.f32.gmra.mxu0 %v857
      %v1312 = vpop.f32.mrf.mxu0
      %v1313 = vadd.f32 0.0, %v1312
      %v1314 = vpop.f32.mrf.mxu0
      %v1315 = vadd.f32 0.0, %v1314
      %1316 = vmatprep.mubr.f32.mxu0 0.0
      %1317 = vmatmul.mubr.f32.gmra.mxu0 %v858
      %v1318 = vpop.f32.mrf.mxu0
      %v1319 = vadd.f32 0.0, %v1318
      %v1320 = vpop.f32.mrf.mxu0
      %v1321 = vadd.f32 0.0, %v1320
      %1322 = vmatprep.mubr.f32.mxu0 0.0
      %1323 = vmatmul.mubr.f32.gmra.mxu0 %v859
      %v1324 = vpop.f32.mrf.mxu0
      %v1325 = vadd.f32 0.0, %v1324
      %v1326 = vpop.f32.mrf.mxu0
      %v1327 = vadd.f32 0.0, %v1326
      %1328 = vmatprep.mubr.f32.mxu0 0.0
      %1329 = vmatmul.mubr.f32.gmra.mxu0 %v860
      %v1330 = vpop.f32.mrf.mxu0
      %v1331 = vadd.f32 0.0, %v1330
      %v1332 = vpop.f32.mrf.mxu0
      %v1333 = vadd.f32 0.0, %v1332
      %1334 = vmatprep.mubr.f32.mxu0 0.0
      %1335 = vmatmul.mubr.f32.gmra.mxu0 %v861
      %v1336 = vpop.f32.mrf.mxu0
      %v1337 = vadd.f32 0.0, %v1336
      %v1338 = vpop.f32.mrf.mxu0
      %v1339 = vadd.f32 0.0, %v1338
      %1340 = vmatprep.mubr.f32.mxu0 0.0
      %1341 = vmatmul.mubr.f32.gmra.mxu0 %v862
      %v1342 = vpop.f32.mrf.mxu0
      %v1343 = vadd.f32 0.0, %v1342
      %v1344 = vpop.f32.mrf.mxu0
      %v1345 = vadd.f32 0.0, %v1344
      %1346 = vmatprep.mubr.f32.mxu0 0.0
      %1347 = vmatmul.mubr.f32.gmra.mxu0 %v863
      %v1348 = vpop.f32.mrf.mxu0
      %v1349 = vadd.f32 0.0, %v1348
      %v1350 = vpop.f32.mrf.mxu0
      %v1351 = vadd.f32 0.0, %v1350
      %1352 = vmatprep.mubr.f32.mxu0 0.0
      %1353 = vmatmul.mubr.f32.gmra.mxu0 %v864
      %v1354 = vpop.f32.mrf.mxu0
      %v1355 = vadd.f32 0.0, %v1354
      %v1356 = vpop.f32.mrf.mxu0
      %v1357 = vadd.f32 0.0, %v1356
      %1358 = vmatprep.mubr.f32.mxu0 0.0
      %1359 = vmatmul.mubr.f32.gmra.mxu0 %v865
      %v1360 = vpop.f32.mrf.mxu0
      %v1361 = vadd.f32 0.0, %v1360
      %v1362 = vpop.f32.mrf.mxu0
      %v1363 = vadd.f32 0.0, %v1362
      %1364 = vmatprep.mubr.f32.mxu0 0.0
      %1365 = vmatmul.mubr.f32.gmra.mxu0 %v866
      %v1366 = vpop.f32.mrf.mxu0
      %v1367 = vadd.f32 0.0, %v1366
      %v1368 = vpop.f32.mrf.mxu0
      %v1369 = vadd.f32 0.0, %v1368
      %1370 = vdwg.mxu0
      %v1371 = vld [vmem:[%s4] sm:$0x1]
      %v1373 = vlaneseq
      %v1374 = vshrl.u32 %v1373, 7
      %v1375 = vsub.s32 0, %v1374
      %v1376 = vrot.slane %v1371, %v1375
      %v1378 = vadd.f32 %v1219, %v1376
      %v1379 = vadd.f32 %v1225, %v1376
      %v1380 = vadd.f32 %v1231, %v1376
      %v1381 = vadd.f32 %v1237, %v1376
      %v1382 = vadd.f32 %v1243, %v1376
      %v1383 = vadd.f32 %v1249, %v1376
      %v1384 = vadd.f32 %v1255, %v1376
      %v1385 = vadd.f32 %v1261, %v1376
      %v1386 = vadd.f32 %v1267, %v1376
      %v1387 = vadd.f32 %v1273, %v1376
      %v1388 = vadd.f32 %v1279, %v1376
      %v1389 = vadd.f32 %v1285, %v1376
      %v1390 = vadd.f32 %v1291, %v1376
      %v1391 = vadd.f32 %v1297, %v1376
      %v1392 = vadd.f32 %v1303, %v1376
      %v1393 = vadd.f32 %v1309, %v1376
      %v1394 = vadd.f32 %v1315, %v1376
      %v1395 = vadd.f32 %v1321, %v1376
      %v1396 = vadd.f32 %v1327, %v1376
      %v1397 = vadd.f32 %v1333, %v1376
      %v1398 = vadd.f32 %v1339, %v1376
      %v1399 = vadd.f32 %v1345, %v1376
      %v1400 = vadd.f32 %v1351, %v1376
      %v1401 = vadd.f32 %v1357, %v1376
      %v1402 = vadd.f32 %v1363, %v1376
      %v1403 = vadd.f32 %v1369, %v1376
      %1404 = vst [vmem:[%s226] sm:$0xff] %v1378
      %1405 = vst [vmem:[%s226 + $0x8] sm:$0xff] %v1379
      %1406 = vst [vmem:[%s226 + $0x10] sm:$0xff] %v1380
      %1407 = vst [vmem:[%s226 + $0x18] sm:$0xff] %v1381
      %1408 = vst [vmem:[%s226 + $0x20] sm:$0xff] %v1382
      %1409 = vst [vmem:[%s226 + $0x28] sm:$0xff] %v1383
      %1410 = vst [vmem:[%s226 + $0x30] sm:$0xff] %v1384
      %1411 = vst [vmem:[%s226 + $0x38] sm:$0xff] %v1385
      %1412 = vst [vmem:[%s226 + $0x40] sm:$0xff] %v1386
      %1413 = vst [vmem:[%s226 + $0x48] sm:$0xff] %v1387
      %1414 = vst [vmem:[%s226 + $0x50] sm:$0xff] %v1388
      %1415 = vst [vmem:[%s226 + $0x58] sm:$0xff] %v1389
      %1416 = vst [vmem:[%s226 + $0x60] sm:$0xff] %v1390
      %1417 = vst [vmem:[%s226 + $0x68] sm:$0xff] %v1391
      %1418 = vst [vmem:[%s226 + $0x70] sm:$0xff] %v1392
      %1419 = vst [vmem:[%s226 + $0x78] sm:$0xff] %v1393
      %1420 = vst [vmem:[%s226 + $0x80] sm:$0xff] %v1394
      %1421 = vst [vmem:[%s226 + $0x88] sm:$0xff] %v1395
      %1422 = vst [vmem:[%s226 + $0x90] sm:$0xff] %v1396
      %1423 = vst [vmem:[%s226 + $0x98] sm:$0xff] %v1397
      %1424 = vst [vmem:[%s226 + $0xa0] sm:$0xff] %v1398
      %1425 = vst [vmem:[%s226 + $0xa8] sm:$0xff] %v1399
      %1426 = vst [vmem:[%s226 + $0xb0] sm:$0xff] %v1400
      %1427 = vst [vmem:[%s226 + $0xb8] sm:$0xff] %v1401
      %1428 = vst [vmem:[%s226 + $0xc0] sm:$0xff] %v1402
      %1429 = vst [vmem:[%s226 + $0xc8] sm:$0xff] %v1403
      %v1430 = vld [vmem:[%s226 + $0x1] sm:$0xff]
      %v1431 = vld [vmem:[%s226 + $0x9] sm:$0xff]
      %v1432 = vld [vmem:[%s226 + $0x11] sm:$0xff]
      %v1433 = vld [vmem:[%s226 + $0x19] sm:$0xff]
      %v1434 = vld [vmem:[%s226 + $0x21] sm:$0xff]
      %v1435 = vld [vmem:[%s226 + $0x29] sm:$0xff]
      %v1436 = vld [vmem:[%s226 + $0x31] sm:$0xff]
      %v1437 = vld [vmem:[%s226 + $0x39] sm:$0xff]
      %v1438 = vld [vmem:[%s226 + $0x41] sm:$0xff]
      %v1439 = vld [vmem:[%s226 + $0x49] sm:$0xff]
      %v1440 = vld [vmem:[%s226 + $0x51] sm:$0xff]
      %v1441 = vld [vmem:[%s226 + $0x59] sm:$0xff]
      %v1442 = vld [vmem:[%s226 + $0x61] sm:$0xff]
      %v1443 = vld [vmem:[%s226 + $0x69] sm:$0xff]
      %v1444 = vld [vmem:[%s226 + $0x71] sm:$0xff]
      %v1445 = vld [vmem:[%s226 + $0x79] sm:$0xff]
      %v1446 = vld [vmem:[%s226 + $0x81] sm:$0xff]
      %v1447 = vld [vmem:[%s226 + $0x89] sm:$0xff]
      %v1448 = vld [vmem:[%s226 + $0x91] sm:$0xff]
      %v1449 = vld [vmem:[%s226 + $0x99] sm:$0xff]
      %v1450 = vld [vmem:[%s226 + $0xa1] sm:$0xff]
      %v1451 = vld [vmem:[%s226 + $0xa9] sm:$0xff]
      %v1452 = vld [vmem:[%s226 + $0xb1] sm:$0xff]
      %v1453 = vld [vmem:[%s226 + $0xb9] sm:$0xff]
      %v1454 = vld [vmem:[%s226 + $0xc1] sm:$0xff]
      %v1455 = vld [vmem:[%s226 + $0xc9] sm:$0x7f]
      %v1456 = vadd.f32 %v1430, %v1217
      %v1457 = vadd.f32 %v1431, %v1223
      %v1458 = vadd.f32 %v1432, %v1229
      %v1459 = vadd.f32 %v1433, %v1235
      %v1460 = vadd.f32 %v1434, %v1241
      %v1461 = vadd.f32 %v1435, %v1247
      %v1462 = vadd.f32 %v1436, %v1253
      %v1463 = vadd.f32 %v1437, %v1259
      %v1464 = vadd.f32 %v1438, %v1265
      %v1465 = vadd.f32 %v1439, %v1271
      %v1466 = vadd.f32 %v1440, %v1277
      %v1467 = vadd.f32 %v1441, %v1283
      %v1468 = vadd.f32 %v1442, %v1289
      %v1469 = vadd.f32 %v1443, %v1295
      %v1470 = vadd.f32 %v1444, %v1301
      %v1471 = vadd.f32 %v1445, %v1307
      %v1472 = vadd.f32 %v1446, %v1313
      %v1473 = vadd.f32 %v1447, %v1319
      %v1474 = vadd.f32 %v1448, %v1325
      %v1475 = vadd.f32 %v1449, %v1331
      %v1476 = vadd.f32 %v1450, %v1337
      %v1477 = vadd.f32 %v1451, %v1343
      %v1478 = vadd.f32 %v1452, %v1349
      %v1479 = vadd.f32 %v1453, %v1355
      %v1480 = vadd.f32 %v1454, %v1361
      %v1481 = vadd.f32 %v1455, %v1367
      %1482 = vst [vmem:[%s226 + $0x1] sm:$0xff] %v1456
      %1483 = vst [vmem:[%s226 + $0x9] sm:$0xff] %v1457
      %1484 = vst [vmem:[%s226 + $0x11] sm:$0xff] %v1458
      %1485 = vst [vmem:[%s226 + $0x19] sm:$0xff] %v1459
      %1486 = vst [vmem:[%s226 + $0x21] sm:$0xff] %v1460
      %1487 = vst [vmem:[%s226 + $0x29] sm:$0xff] %v1461
      %1488 = vst [vmem:[%s226 + $0x31] sm:$0xff] %v1462
      %1489 = vst [vmem:[%s226 + $0x39] sm:$0xff] %v1463
      %1490 = vst [vmem:[%s226 + $0x41] sm:$0xff] %v1464
      %1491 = vst [vmem:[%s226 + $0x49] sm:$0xff] %v1465
      %1492 = vst [vmem:[%s226 + $0x51] sm:$0xff] %v1466
      %1493 = vst [vmem:[%s226 + $0x59] sm:$0xff] %v1467
      %1494 = vst [vmem:[%s226 + $0x61] sm:$0xff] %v1468
      %1495 = vst [vmem:[%s226 + $0x69] sm:$0xff] %v1469
      %1496 = vst [vmem:[%s226 + $0x71] sm:$0xff] %v1470
      %1497 = vst [vmem:[%s226 + $0x79] sm:$0xff] %v1471
      %1498 = vst [vmem:[%s226 + $0x81] sm:$0xff] %v1472
      %1499 = vst [vmem:[%s226 + $0x89] sm:$0xff] %v1473
      %1500 = vst [vmem:[%s226 + $0x91] sm:$0xff] %v1474
      %1501 = vst [vmem:[%s226 + $0x99] sm:$0xff] %v1475
      %1502 = vst [vmem:[%s226 + $0xa1] sm:$0xff] %v1476
      %1503 = vst [vmem:[%s226 + $0xa9] sm:$0xff] %v1477
      %1504 = vst [vmem:[%s226 + $0xb1] sm:$0xff] %v1478
      %1505 = vst [vmem:[%s226 + $0xb9] sm:$0xff] %v1479
      %1506 = vst [vmem:[%s226 + $0xc1] sm:$0xff] %v1480
      %1507 = vst [vmem:[%s226 + $0xc9] sm:$0x7f] %v1481
      %v1508 = vld [vmem:[%s226 + $0xa] sm:$0xff]
      %v1509 = vld [vmem:[%s226 + $0x12] sm:$0xff]
      %v1510 = vld [vmem:[%s226 + $0x1a] sm:$0xff]
      %v1511 = vld [vmem:[%s226 + $0x22] sm:$0xff]
      %v1512 = vld [vmem:[%s226 + $0x2a] sm:$0xff]
      %v1513 = vld [vmem:[%s226 + $0x32] sm:$0xff]
      %v1514 = vld [vmem:[%s226 + $0x3a] sm:$0xff]
      %v1515 = vld [vmem:[%s226 + $0x42] sm:$0xff]
      %v1516 = vld [vmem:[%s226 + $0x4a] sm:$0xff]
      %v1517 = vld [vmem:[%s226 + $0x52] sm:$0xff]
      %v1518 = vld [vmem:[%s226 + $0x5a] sm:$0xff]
      %v1519 = vld [vmem:[%s226 + $0x62] sm:$0xff]
      %v1520 = vld [vmem:[%s226 + $0x6a] sm:$0xff]
      %v1521 = vld [vmem:[%s226 + $0x72] sm:$0xff]
      %v1522 = vld [vmem:[%s226 + $0x7a] sm:$0xff]
      %v1523 = vld [vmem:[%s226 + $0x82] sm:$0xff]
      %v1524 = vld [vmem:[%s226 + $0x8a] sm:$0xff]
      %v1525 = vld [vmem:[%s226 + $0x92] sm:$0xff]
      %v1526 = vld [vmem:[%s226 + $0x9a] sm:$0xff]
      %v1527 = vld [vmem:[%s226 + $0xa2] sm:$0xff]
      %v1528 = vld [vmem:[%s226 + $0xaa] sm:$0xff]
      %v1529 = vld [vmem:[%s226 + $0xb2] sm:$0xff]
      %v1530 = vld [vmem:[%s226 + $0xba] sm:$0xff]
      %v1531 = vld [vmem:[%s226 + $0xc2] sm:$0xff]
      %v1532 = vld [vmem:[%s226 + $0xca] sm:$0x3f]
      %v1533 = vadd.f32 %v1508, %v1000
      %v1534 = vadd.f32 %v1509, %v1006
      %v1535 = vadd.f32 %v1510, %v1012
      %v1536 = vadd.f32 %v1511, %v1018
      %v1537 = vadd.f32 %v1512, %v1024
      %v1538 = vadd.f32 %v1513, %v1030
      %v1539 = vadd.f32 %v1514, %v1036
      %v1540 = vadd.f32 %v1515, %v1042
      %v1541 = vadd.f32 %v1516, %v1048
      %v1542 = vadd.f32 %v1517, %v1054
      %v1543 = vadd.f32 %v1518, %v1060
      %v1544 = vadd.f32 %v1519, %v1066
      %v1545 = vadd.f32 %v1520, %v1072
      %v1546 = vadd.f32 %v1521, %v1078
      %v1547 = vadd.f32 %v1522, %v1084
      %v1548 = vadd.f32 %v1523, %v1090
      %v1549 = vadd.f32 %v1524, %v1096
      %v1550 = vadd.f32 %v1525, %v1102
      %v1551 = vadd.f32 %v1526, %v1108
      %v1552 = vadd.f32 %v1527, %v1114
      %v1553 = vadd.f32 %v1528, %v1120
      %v1554 = vadd.f32 %v1529, %v1126
      %v1555 = vadd.f32 %v1530, %v1132
      %v1556 = vadd.f32 %v1531, %v1138
      %v1557 = vadd.f32 %v1532, %v1144
      %1558 = vst [vmem:[%s226 + $0xa] sm:$0xff] %v1533
      %1559 = vst [vmem:[%s226 + $0x12] sm:$0xff] %v1534
      %1560 = vst [vmem:[%s226 + $0x1a] sm:$0xff] %v1535
      %1561 = vst [vmem:[%s226 + $0x22] sm:$0xff] %v1536
      %1562 = vst [vmem:[%s226 + $0x2a] sm:$0xff] %v1537
      %1563 = vst [vmem:[%s226 + $0x32] sm:$0xff] %v1538
      %1564 = vst [vmem:[%s226 + $0x3a] sm:$0xff] %v1539
      %1565 = vst [vmem:[%s226 + $0x42] sm:$0xff] %v1540
      %1566 = vst [vmem:[%s226 + $0x4a] sm:$0xff] %v1541
      %1567 = vst [vmem:[%s226 + $0x52] sm:$0xff] %v1542
      %1568 = vst [vmem:[%s226 + $0x5a] sm:$0xff] %v1543
      %1569 = vst [vmem:[%s226 + $0x62] sm:$0xff] %v1544
      %1570 = vst [vmem:[%s226 + $0x6a] sm:$0xff] %v1545
      %1571 = vst [vmem:[%s226 + $0x72] sm:$0xff] %v1546
      %1572 = vst [vmem:[%s226 + $0x7a] sm:$0xff] %v1547
      %1573 = vst [vmem:[%s226 + $0x82] sm:$0xff] %v1548
      %1574 = vst [vmem:[%s226 + $0x8a] sm:$0xff] %v1549
      %1575 = vst [vmem:[%s226 + $0x92] sm:$0xff] %v1550
      %1576 = vst [vmem:[%s226 + $0x9a] sm:$0xff] %v1551
      %1577 = vst [vmem:[%s226 + $0xa2] sm:$0xff] %v1552
      %1578 = vst [vmem:[%s226 + $0xaa] sm:$0xff] %v1553
      %1579 = vst [vmem:[%s226 + $0xb2] sm:$0xff] %v1554
      %1580 = vst [vmem:[%s226 + $0xba] sm:$0xff] %v1555
      %1581 = vst [vmem:[%s226 + $0xc2] sm:$0xff] %v1556
      %1582 = vst [vmem:[%s226 + $0xca] sm:$0x3f] %v1557
      %v1583 = vld [vmem:[%s226 + $0xb] sm:$0xff]
      %v1584 = vld [vmem:[%s226 + $0x13] sm:$0xff]
      %v1585 = vld [vmem:[%s226 + $0x1b] sm:$0xff]
      %v1586 = vld [vmem:[%s226 + $0x23] sm:$0xff]
      %v1587 = vld [vmem:[%s226 + $0x2b] sm:$0xff]
      %v1588 = vld [vmem:[%s226 + $0x33] sm:$0xff]
      %v1589 = vld [vmem:[%s226 + $0x3b] sm:$0xff]
      %v1590 = vld [vmem:[%s226 + $0x43] sm:$0xff]
      %v1591 = vld [vmem:[%s226 + $0x4b] sm:$0xff]
      %v1592 = vld [vmem:[%s226 + $0x53] sm:$0xff]
      %v1593 = vld [vmem:[%s226 + $0x5b] sm:$0xff]
      %v1594 = vld [vmem:[%s226 + $0x63] sm:$0xff]
      %v1595 = vld [vmem:[%s226 + $0x6b] sm:$0xff]
      %v1596 = vld [vmem:[%s226 + $0x73] sm:$0xff]
      %v1597 = vld [vmem:[%s226 + $0x7b] sm:$0xff]
      %v1598 = vld [vmem:[%s226 + $0x83] sm:$0xff]
      %v1599 = vld [vmem:[%s226 + $0x8b] sm:$0xff]
      %v1600 = vld [vmem:[%s226 + $0x93] sm:$0xff]
      %v1601 = vld [vmem:[%s226 + $0x9b] sm:$0xff]
      %v1602 = vld [vmem:[%s226 + $0xa3] sm:$0xff]
      %v1603 = vld [vmem:[%s226 + $0xab] sm:$0xff]
      %v1604 = vld [vmem:[%s226 + $0xb3] sm:$0xff]
      %v1605 = vld [vmem:[%s226 + $0xbb] sm:$0xff]
      %v1606 = vld [vmem:[%s226 + $0xc3] sm:$0xff]
      %v1607 = vld [vmem:[%s226 + $0xcb] sm:$0x1f]
      %v1608 = vadd.f32 %v1583, %v998
      %v1609 = vadd.f32 %v1584, %v1004
      %v1610 = vadd.f32 %v1585, %v1010
      %v1611 = vadd.f32 %v1586, %v1016
      %v1612 = vadd.f32 %v1587, %v1022
      %v1613 = vadd.f32 %v1588, %v1028
      %v1614 = vadd.f32 %v1589, %v1034
      %v1615 = vadd.f32 %v1590, %v1040
      %v1616 = vadd.f32 %v1591, %v1046
      %v1617 = vadd.f32 %v1592, %v1052
      %v1618 = vadd.f32 %v1593, %v1058
      %v1619 = vadd.f32 %v1594, %v1064
      %v1620 = vadd.f32 %v1595, %v1070
      %v1621 = vadd.f32 %v1596, %v1076
      %v1622 = vadd.f32 %v1597, %v1082
      %v1623 = vadd.f32 %v1598, %v1088
      %v1624 = vadd.f32 %v1599, %v1094
      %v1625 = vadd.f32 %v1600, %v1100
      %v1626 = vadd.f32 %v1601, %v1106
      %v1627 = vadd.f32 %v1602, %v1112
      %v1628 = vadd.f32 %v1603, %v1118
      %v1629 = vadd.f32 %v1604, %v1124
      %v1630 = vadd.f32 %v1605, %v1130
      %v1631 = vadd.f32 %v1606, %v1136
      %v1632 = vadd.f32 %v1607, %v1142
      %1633 = vst [vmem:[%s226 + $0xb] sm:$0xff] %v1608
      %1634 = vst [vmem:[%s226 + $0x13] sm:$0xff] %v1609
      %1635 = vst [vmem:[%s226 + $0x1b] sm:$0xff] %v1610
      %1636 = vst [vmem:[%s226 + $0x23] sm:$0xff] %v1611
      %1637 = vst [vmem:[%s226 + $0x2b] sm:$0xff] %v1612
      %1638 = vst [vmem:[%s226 + $0x33] sm:$0xff] %v1613
      %1639 = vst [vmem:[%s226 + $0x3b] sm:$0xff] %v1614
      %1640 = vst [vmem:[%s226 + $0x43] sm:$0xff] %v1615
      %1641 = vst [vmem:[%s226 + $0x4b] sm:$0xff] %v1616
      %1642 = vst [vmem:[%s226 + $0x53] sm:$0xff] %v1617
      %1643 = vst [vmem:[%s226 + $0x5b] sm:$0xff] %v1618
      %1644 = vst [vmem:[%s226 + $0x63] sm:$0xff] %v1619
      %1645 = vst [vmem:[%s226 + $0x6b] sm:$0xff] %v1620
      %1646 = vst [vmem:[%s226 + $0x73] sm:$0xff] %v1621
      %1647 = vst [vmem:[%s226 + $0x7b] sm:$0xff] %v1622
      %1648 = vst [vmem:[%s226 + $0x83] sm:$0xff] %v1623
      %1649 = vst [vmem:[%s226 + $0x8b] sm:$0xff] %v1624
      %1650 = vst [vmem:[%s226 + $0x93] sm:$0xff] %v1625
      %1651 = vst [vmem:[%s226 + $0x9b] sm:$0xff] %v1626
      %1652 = vst [vmem:[%s226 + $0xa3] sm:$0xff] %v1627
      %1653 = vst [vmem:[%s226 + $0xab] sm:$0xff] %v1628
      %1654 = vst [vmem:[%s226 + $0xb3] sm:$0xff] %v1629
      %1655 = vst [vmem:[%s226 + $0xbb] sm:$0xff] %v1630
      %1656 = vst [vmem:[%s226 + $0xc3] sm:$0xff] %v1631
      %1657 = vst [vmem:[%s226 + $0xcb] sm:$0x1f] %v1632
      %s1658 = smul.u32 26, %s16
      %p1659 = scmp.lt.s32.totalorder %s1658, 51
      %s1660 = scalar_select %p1659, %s1658, 51
      %s1661 = smul.addr %s1660, 8
      %s1662 = scalar_lea.vmem %s5, %s1661
      // Predicated region
      $region41: #{_lambda_.1} parent=39 // pred_check
        %p1663 = pneg %p144
      $region42: #{_lambda_.1} parent=39 // pred_check_branch
        %1665 = sbr.rel (%p1663) target = $region44
      $region43: #{_lambda_.1} parent=39 // pred_region
        %s1666 = smul.u32 26, %s16
      $region44: #{_lambda_.1} parent=39 // pred_fallthru
        _
    $region40: #{_lambda_.1} parent=5 // pred_fallthru
      _
    %p1667 = scmp.le.s32.totalorder 2, %s11
    // Predicated region
    $region45: #{_lambda_.1} parent=5 // pred_check
      %p1668 = pneg %p1667
    $region46: #{_lambda_.1} parent=5 // pred_check_branch
      %1670 = sbr.rel (%p1668) target = $region48
    $region47: #{_lambda_.1} parent=5 // pred_region
      %s1671 = ssub.s32 %s11, 2
      // Predicated region
      $region49: #{_lambda_.1} parent=47 // pred_check
        %p1672 = pneg %p150
      $region50: #{_lambda_.1} parent=47 // pred_check_branch
        %1674 = sbr.rel (%p1672) target = $region52
      $region51: #{_lambda_.1} parent=47 // pred_region
        %s1675 = smul.u32 26, %s17
        %p1676 = scmp.lt.s32.totalorder %s1675, 51
        %s1677 = scalar_select %p1676, %s1675, 51
        %s1678 = smul.addr %s1677, 8
        %s1679 = scalar_lea.vmem %s5, %s1678
      $region52: #{_lambda_.1} parent=47 // pred_fallthru
        _
    $region48: #{_lambda_.1} parent=5 // pred_fallthru
      _
  $region6: #{_lambda_.1} parent=0 // loop_footer
    %s15 = sadd.s32 1, %s11
  $region7: #{_lambda_.1} parent=0 // loop_footer_branch
    %10 = sbr.rel target = $region3
  $region8: #{_lambda_.1} parent=0 // loop_exit
    _

</llo_original>
